<compile_context>
chip_gen: v7x
topology: tpu7x:2x2x1
jax: 0.10.0
libtpu: 0.0.40
codegen_flags: <defaults>
</compile_context>

<pallas_src>
import functools
import math

import jax
import jax.numpy as jnp
import numpy as np
from jax import lax
from jax.experimental import pallas as pl
from jax.experimental.pallas import tpu as pltpu

LEAKY_SLOPE = 0.1
BN_EPS = 1e-5


# ----------------------------- Pallas kernel ------------------------------- #

def _fused_kernel(p_ref, ws_ref, bs_ref, wl_ref, sh_ref, bl_ref, wt_ref, o_ref,
                  *, tb, rows):
    """Whole Two_Layer_CNN_Pro forward for a tile of `tb` batch elements.

    Stage 1 (stem): one (tb*4R, 33)@(33, 48) matmul covers the three
      first-stage convs (block-diagonal BN-folded weight) for all four 2x2
      pooling-window positions; the pool is the max of the four row blocks
      (invariant: bias shared across positions + monotone activation).
    Stage 2 (conv_last): 3x3 conv as 9 taps; each tap's shifted / zero-padded
      stem map comes from a tiny 0/1 shift matmul (R,R)@(R,48), then a
      (R,48)@(48,128) matmul accumulated in f32.  No HBM im2col.
    Stage 3 (tail): AdaptiveAvgPool(5,5)+fc+fc2 pre-folded into a per-(h,w,c)
      weight; emits a lane-dense (tb, 128) partial reduction.
    """
    r = rows
    k = p_ref.shape[-1]
    ws = ws_ref[...]
    if tb == 1:
        p = p_ref[0]                                        # (4R, 33) bf16
    else:
        # clean merge: each batch chunk is 4R = 224 rows (multiple of 16).
        p = p_ref[...].reshape(tb * 4 * r, k)
    m = jnp.dot(p, ws, preferred_element_type=jnp.float32)  # (tb*4R, 48) f32

    outs = []
    for b in range(tb):
        base = b * 4 * r
        m0 = m[base:base + r]
        m1 = m[base + r:base + 2 * r]
        m2 = m[base + 2 * r:base + 3 * r]
        m3 = m[base + 3 * r:base + 4 * r]
        # Fused 2x2 MaxPool epilogue: max(leaky(d_i + bias)) == leaky(max(d_i)+bias)
        # because the bias is shared across the four positions and LeakyReLU is
        # monotone (holds for any BN-folded scale sign since it is inside d_i).
        mp = jnp.maximum(jnp.maximum(m0, m1), jnp.maximum(m2, m3)) + bs_ref[...]
        s_b = jnp.where(mp >= 0, mp, LEAKY_SLOPE * mp).astype(jnp.bfloat16)  # (R,48)

        acc = jnp.zeros((r, bl_ref.shape[-1]), jnp.float32)
        for t in range(9):
            # 0/1 shift matrix = exact row gather with zero padding at borders.
            s_t = jnp.dot(sh_ref[t], s_b, preferred_element_type=jnp.float32)
            acc = acc + jnp.dot(s_t.astype(jnp.bfloat16), wl_ref[t],
                                preferred_element_type=jnp.float32)
        acc = acc + bl_ref[...]
        y = jnp.where(acc >= 0, acc, LEAKY_SLOPE * acc)      # (R, 128) f32
        # Folded AdaptiveAvgPool + fc + fc2: per-batch (1, 128) partial.
        outs.append(jnp.sum(y * wt_ref[...], axis=0, keepdims=True))
    o_ref[0] = outs[0] if tb == 1 else jnp.concatenate(outs, axis=0)


def _pick_tb(batch, rows):
    """Largest batch tile dividing `batch` that keeps >=2 grid steps (v7x has
    two TensorCores) while growing per-step matmul rows toward ~512."""
    limit = max(1, min(batch // 2, max(1, 512 // max(rows, 1))))
    tb = 1
    for cand in range(1, limit + 1):
        if batch % cand == 0:
            tb = cand
    return tb


def fused_forward_pallas(p_all, w_stem, b_stem, wl_taps, shift, b_last, w_tail, tb):
    B, FR, K = p_all.shape
    R = FR // 4
    G = B // tb
    Cout = wl_taps.shape[-1]
    kernel = functools.partial(_fused_kernel, tb=tb, rows=R)
    grid_spec = pltpu.PrefetchScalarGridSpec(
        num_scalar_prefetch=0,
        grid=(G,),
        in_specs=[
            pl.BlockSpec((tb, FR, K), lambda i: (i, 0, 0)),
            pl.BlockSpec(w_stem.shape, lambda i: (0, 0)),
            pl.BlockSpec(b_stem.shape, lambda i: (0, 0)),
            pl.BlockSpec(wl_taps.shape, lambda i: (0, 0, 0)),
            pl.BlockSpec(shift.shape, lambda i: (0, 0, 0)),
            pl.BlockSpec(b_last.shape, lambda i: (0, 0)),
            pl.BlockSpec(w_tail.shape, lambda i: (0, 0)),
        ],
        out_specs=pl.BlockSpec((1, tb, Cout), lambda i: (i, 0, 0)),
    )
    return pl.pallas_call(
        kernel,
        out_shape=jax.ShapeDtypeStruct((G, tb, Cout), jnp.float32),
        grid_spec=grid_spec,
        compiler_params=pltpu.CompilerParams(dimension_semantics=("parallel",)),
    )(p_all, w_stem, b_stem, wl_taps, shift, b_last, w_tail)


# ------------------------------- JAX glue ----------------------------------- #

def adaptive_avg_matrix(in_size, out_size):
    """PyTorch AdaptiveAvgPool averaging matrix (out_size, in_size)."""
    m = np.zeros((out_size, in_size), dtype=np.float32)
    for i in range(out_size):
        s = (i * in_size) // out_size
        e = int(math.ceil((i + 1) * in_size / out_size))
        m[i, s:e] = 1.0 / (e - s)
    return m


def _shift_matrices(Ho, Wo):
    """(9, R, R) 0/1 matrices realising the padded 3x3 gather as matmuls."""
    R = Ho * Wo
    P = np.zeros((9, R, R), dtype=np.float32)
    for di in (-1, 0, 1):
        for dj in (-1, 0, 1):
            t = (di + 1) * 3 + (dj + 1)
            for h in range(Ho):
                for w in range(Wo):
                    hh, ww = h + di, w + dj
                    if 0 <= hh < Ho and 0 <= ww < Wo:
                        P[t, h * Wo + w, hh * Wo + ww] = 1.0
    return P


def _fold_bn(w, bias, bn, eps=BN_EPS):
    gamma, beta, mean, var = bn
    scale = gamma / jnp.sqrt(var + eps)
    return w * scale[:, None, None, None], (bias - mean) * scale + beta


def two_layer_cnn_pro_forward(params, x, tb=None):
    """x: (B, 14, T) float32 -> (B, 1). Eval-mode forward."""
    B, H, T = x.shape                       # H == eeg_channel == 14
    Ho, Wo = H // 2, T // 2                 # after MaxPool2d(2,2) (floor mode)
    R = Ho * Wo                             # rows per batch element after pool
    if tb is None:
        tb = _pick_tb(B, R)

    # ---- fold eval-mode BN into conv weights -------------------------------
    w_sp, b_sp = _fold_bn(params["w_sp"], params["b_sp"], params["bn_sp"])
    w_tm, b_tm = _fold_bn(params["w_tm"], params["b_tm"], params["bn_tm"])
    w_st, b_st = _fold_bn(params["w_st"], params["b_st"], params["bn_st"])
    w_ls, b_ls = _fold_bn(params["w_last"], params["b_last"], params["bn_last"])

    kh_sp = w_sp.shape[2]                   # 13
    kw_tm = w_tm.shape[3]                   # 11
    Kst = 9
    Kstem = kh_sp + kw_tm + Kst             # 33
    C1 = w_sp.shape[0]                      # 16
    Cc = 3 * C1                             # 48
    ph, pw = math.ceil((kh_sp - 1) / 2), math.ceil((kw_tm - 1) / 2)   # 6, 5

    # Block-diagonal fused stem weight (33, 48); channel order matches
    # torch.cat((x1, x2, x3), dim=1).
    w_stem = jnp.zeros((Kstem, Cc), jnp.float32)
    w_stem = w_stem.at[:kh_sp, :C1].set(w_sp.reshape(C1, kh_sp).T)
    w_stem = w_stem.at[kh_sp:kh_sp + kw_tm, C1:2 * C1].set(w_tm.reshape(C1, kw_tm).T)
    w_stem = w_stem.at[kh_sp + kw_tm:, 2 * C1:].set(w_st.reshape(C1, Kst).T)
    b_stem = jnp.concatenate([b_sp, b_tm, b_st]).reshape(1, Cc)

    # ---- stem im2col: one padded map covers all three convs' paddings ------
    # TODO(synk): for large B*T move this im2col in-kernel (shifted VMEM slices
    # of the raw (14,T) rows) to cut input HBM bytes ~16x.
    xpad = jnp.pad(x, ((0, 0), (ph, ph), (pw, pw)))
    cols = []
    for di in range(kh_sp):                 # spatial  conv, pad (ph, 0)
        cols.append(xpad[:, di:di + H, pw:pw + T])
    for dj in range(kw_tm):                 # temporal conv, pad (0, pw)
        cols.append(xpad[:, ph:ph + H, dj:dj + T])
    for di in range(3):                     # spatial-temporal conv, pad (1, 1)
        for dj in range(3):
            cols.append(xpad[:, ph - 1 + di:ph - 1 + di + H,
                             pw - 1 + dj:pw - 1 + dj + T])
    pfull = jnp.stack(cols, axis=-1)[:, :2 * Ho, :2 * Wo, :]     # (B, 2Ho, 2Wo, 33)

    # Four 2x2 pool-window positions stacked along the row axis -> one matmul.
    p_all = jnp.concatenate(
        [pfull[:, 0::2, 0::2, :].reshape(B, R, Kstem),
         pfull[:, 0::2, 1::2, :].reshape(B, R, Kstem),
         pfull[:, 1::2, 0::2, :].reshape(B, R, Kstem),
         pfull[:, 1::2, 1::2, :].reshape(B, R, Kstem)],
        axis=1).astype(jnp.bfloat16)                              # (B, 4R, 33)

    # ---- conv_last weights per 3x3 tap: OIHW -> tap-major (9, 48, 128) ------
    Cout = w_ls.shape[0]                    # 128
    wl_taps = jnp.transpose(w_ls, (2, 3, 1, 0)).reshape(9, Cc, Cout).astype(jnp.bfloat16)
    b_last = b_ls.reshape(1, Cout)

    # 0/1 shift matrices: the padded 3x3 gather stays in VMEM as tiny matmuls.
    shift = jnp.asarray(_shift_matrices(Ho, Wo), dtype=jnp.bfloat16)   # (9, R, R)

    # ---- fold AdaptiveAvgPool2d((5,5)) + fc + fc2 into one (h,w,c) weight ---
    g = (params["fc2_w"] @ params["fc_w"]).reshape(Cout, 5, 5)      # (128, 5, 5)
    mh = jnp.asarray(adaptive_avg_matrix(Ho, 5))                    # (5, Ho)
    mw = jnp.asarray(adaptive_avg_matrix(Wo, 5))                    # (5, Wo)
    w_tail = jnp.einsum("ph,qw,cpq->hwc", mh, mw, g).reshape(R, Cout)
    b_tail = params["fc2_w"] @ params["fc_b"] + params["fc2_b"]     # (1,)

    partial = fused_forward_pallas(p_all, w_stem.astype(jnp.bfloat16), b_stem,
                                   wl_taps, shift, b_last, w_tail, tb)
    partial = partial.reshape(B, Cout)                              # (B, 128)
    return partial.sum(axis=-1, keepdims=True) + b_tail


# ------------------------------ param init ---------------------------------- #

def init_params(key):
    def u(k, shape, bound):
        return jax.random.uniform(k, shape, jnp.float32, -bound, bound)

    def bn(k, c):
        k1, k2, k3, k4 = jax.random.split(k, 4)
        gamma = jax.random.uniform(k1, (c,), jnp.float32, 0.5, 1.5)
        beta = jax.random.uniform(k2, (c,), jnp.float32, -0.1, 0.1)
        mean = jax.random.uniform(k3, (c,), jnp.float32, -0.1, 0.1)
        var = jax.random.uniform(k4, (c,), jnp.float32, 0.5, 1.5)
        return (gamma, beta, mean, var)

    ks = jax.random.split(key, 16)
    p = {}
    p["w_sp"] = u(ks[0], (16, 1, 13, 1), 1.0 / math.sqrt(13))
    p["b_sp"] = u(ks[1], (16,), 1.0 / math.sqrt(13))
    p["w_tm"] = u(ks[2], (16, 1, 1, 11), 1.0 / math.sqrt(11))
    p["b_tm"] = u(ks[3], (16,), 1.0 / math.sqrt(11))
    p["w_st"] = u(ks[4], (16, 1, 3, 3), 1.0 / math.sqrt(9))
    p["b_st"] = u(ks[5], (16,), 1.0 / math.sqrt(9))
    p["w_last"] = u(ks[6], (128, 48, 3, 3), 1.0 / math.sqrt(48 * 9))
    p["b_last"] = u(ks[7], (128,), 1.0 / math.sqrt(48 * 9))
    p["bn_sp"] = bn(ks[8], 16)
    p["bn_tm"] = bn(ks[9], 16)
    p["bn_st"] = bn(ks[10], 16)
    p["bn_last"] = bn(ks[11], 128)
    p["fc_w"] = u(ks[12], (10, 5 * 5 * 128), 1.0 / math.sqrt(5 * 5 * 128))
    p["fc_b"] = u(ks[13], (10,), 1.0 / math.sqrt(5 * 5 * 128))
    p["fc2_w"] = u(ks[14], (1, 10), 1.0 / math.sqrt(10))
    p["fc2_b"] = u(ks[15], (1,), 1.0 / math.sqrt(10))
    return p


# --------------------------- pure-JAX reference ------------------------------ #

def reference_forward(params, x, eps=BN_EPS):
    def conv(z, w, b, pad):
        y = lax.conv_general_dilated(z, w, (1, 1),
                                     ((pad[0], pad[0]), (pad[1], pad[1])),
                                     dimension_numbers=("NCHW", "OIHW", "NCHW"))
        return y + b[None, :, None, None]

    def bn(z, g, b, m, v):
        return ((z - m[None, :, None, None]) / jnp.sqrt(v[None, :, None, None] + eps)
                * g[None, :, None, None] + b[None, :, None, None])

    def lrelu(z):
        return jnp.where(z >= 0, z, 0.1 * z)

    def maxpool(z):
        B, C, H, W = z.shape
        Ho, Wo = H // 2, W // 2
        z = z[:, :, :2 * Ho, :2 * Wo].reshape(B, C, Ho, 2, Wo, 2)
        return z.max(axis=(3, 5))

    def adapool(z, oh, ow):
        Mh = jnp.asarray(adaptive_avg_matrix(z.shape[2], oh))
        Mw = jnp.asarray(adaptive_avg_matrix(z.shape[3], ow))
        return jnp.einsum("ph,bchw,qw->bcpq", Mh, z, Mw)

    x4 = x[:, None]
    x1 = maxpool(lrelu(bn(conv(x4, params["w_sp"], params["b_sp"], (6, 0)), *params["bn_sp"])))
    x2 = maxpool(lrelu(bn(conv(x4, params["w_tm"], params["b_tm"], (0, 5)), *params["bn_tm"])))
    x3 = maxpool(lrelu(bn(conv(x4, params["w_st"], params["b_st"], (1, 1)), *params["bn_st"])))
    xc = jnp.concatenate([x1, x2, x3], axis=1)
    y = lrelu(bn(conv(xc, params["w_last"], params["b_last"], (1, 1)), *params["bn_last"]))
    p = adapool(y, 5, 5)
    feat = p.reshape(p.shape[0], -1)
    h = feat @ params["fc_w"].T + params["fc_b"]
    return h @ params["fc2_w"].T + params["fc2_b"]


# ---------------------------------- main ------------------------------------- #

if __name__ == "__main__":
    key = jax.random.PRNGKey(0)
    k_param, k_x = jax.random.split(key)
    params = init_params(k_param)

    # EEG-style input: batch=2, eeg_channel=14 (fixed by module), time=16.
    x = jax.random.normal(k_x, (2, 14, 16), dtype=jnp.float32)

    fwd = jax.jit(two_layer_cnn_pro_forward)
    out = jax.block_until_ready(fwd(params, x))
    assert out.shape == (2, 1)

    ref = jax.block_until_ready(reference_forward(params, x))
    # bf16 MXU operands (f32 accumulation) -> loosened tolerance vs f32 reference.
    np.testing.assert_allclose(np.asarray(out), np.asarray(ref), rtol=5e-2, atol=5e-2)

    print("KERNEL_OK")
</pallas_src>

<mosaic_0001>
module attributes {stable_mosaic.version = 11 : i64} {
  func.func @_fused_kernel(%arg0: i32, %arg1: memref<1x224x33xbf16, #tpu.memory_space<vmem>>, %arg2: memref<33x48xbf16, #tpu.memory_space<vmem>>, %arg3: memref<1x48xf32, #tpu.memory_space<vmem>>, %arg4: memref<9x48x128xbf16, #tpu.memory_space<vmem>>, %arg5: memref<9x56x56xbf16, #tpu.memory_space<vmem>>, %arg6: memref<1x128xf32, #tpu.memory_space<vmem>>, %arg7: memref<56x128xf32, #tpu.memory_space<vmem>>, %arg8: memref<1x1x128xf32, #tpu.memory_space<vmem>>) attributes {dimension_semantics = [#tpu.dimension_semantics<parallel>], iteration_bounds = array<i64: 2>, scalar_prefetch = 0 : i64, scratch_operands = 0 : i64, tpu.core_type = #tpu.core_type<tc>, window_params = [{transform_indices = @transform_0, window_bounds = array<i64: 1, 224, 33>}, {pipeline_mode = #tpu.pipeline_mode<synchronous>, transform_indices = @transform_1, window_bounds = array<i64: 33, 48>}, {pipeline_mode = #tpu.pipeline_mode<synchronous>, transform_indices = @transform_2, window_bounds = array<i64: 1, 48>}, {pipeline_mode = #tpu.pipeline_mode<synchronous>, transform_indices = @transform_3, window_bounds = array<i64: 9, 48, 128>}, {pipeline_mode = #tpu.pipeline_mode<synchronous>, transform_indices = @transform_4, window_bounds = array<i64: 9, 56, 56>}, {pipeline_mode = #tpu.pipeline_mode<synchronous>, transform_indices = @transform_5, window_bounds = array<i64: 1, 128>}, {pipeline_mode = #tpu.pipeline_mode<synchronous>, transform_indices = @transform_6, window_bounds = array<i64: 56, 128>}, {transform_indices = @transform_7, window_bounds = array<i64: 1, 1, 128>}]} {
    %c0 = arith.constant 0 : index
    %c0_0 = arith.constant 0 : index
    %0 = vector.load %arg2[%c0, %c0_0] : memref<33x48xbf16, #tpu.memory_space<vmem>>, vector<33x48xbf16>
    %c0_1 = arith.constant 0 : index
    %c0_2 = arith.constant 0 : index
    %c0_3 = arith.constant 0 : index
    %1 = vector.load %arg1[%c0_1, %c0_2, %c0_3] : memref<1x224x33xbf16, #tpu.memory_space<vmem>>, vector<1x224x33xbf16>
    %2 = vector.shape_cast %1 : vector<1x224x33xbf16> to vector<224x33xbf16>
    %cst = arith.constant dense<0.000000e+00> : vector<224x48xf32>
    %3 = tpu.matmul %2, %0, %cst {dimension_numbers = #tpu.dot_dimension_numbers<[1], [0], [0], [1], [0, 0, 1, 1], [], []>} : vector<224x33xbf16>, vector<33x48xbf16>, vector<224x48xf32> -> vector<224x48xf32>
    %4 = vector.extract_strided_slice %3 {offsets = [0, 0], sizes = [56, 48], strides = [1, 1]} : vector<224x48xf32> to vector<56x48xf32>
    %5 = vector.extract_strided_slice %3 {offsets = [56, 0], sizes = [56, 48], strides = [1, 1]} : vector<224x48xf32> to vector<56x48xf32>
    %6 = vector.extract_strided_slice %3 {offsets = [112, 0], sizes = [56, 48], strides = [1, 1]} : vector<224x48xf32> to vector<56x48xf32>
    %7 = vector.extract_strided_slice %3 {offsets = [168, 0], sizes = [56, 48], strides = [1, 1]} : vector<224x48xf32> to vector<56x48xf32>
    %8 = arith.maximumf %4, %5 : vector<56x48xf32>
    %9 = arith.maximumf %6, %7 : vector<56x48xf32>
    %10 = arith.maximumf %8, %9 : vector<56x48xf32>
    %c0_4 = arith.constant 0 : index
    %c0_5 = arith.constant 0 : index
    %11 = vector.load %arg3[%c0_4, %c0_5] : memref<1x48xf32, #tpu.memory_space<vmem>>, vector<1x48xf32>
    %12 = vector.broadcast %11 : vector<1x48xf32> to vector<56x48xf32>
    %13 = arith.addf %10, %12 : vector<56x48xf32>
    %cst_6 = arith.constant 0.000000e+00 : f32
    %14 = vector.broadcast %cst_6 : f32 to vector<56x48xf32>
    %15 = arith.cmpf oge, %13, %14 : vector<56x48xf32>
    %cst_7 = arith.constant 1.000000e-01 : f32
    %16 = vector.broadcast %cst_7 : f32 to vector<56x48xf32>
    %17 = arith.mulf %16, %13 : vector<56x48xf32>
    %18 = arith.select %15, %13, %17 : vector<56x48xi1>, vector<56x48xf32>
    %19 = arith.truncf %18 : vector<56x48xf32> to vector<56x48xbf16>
    %cst_8 = arith.constant 0.000000e+00 : f32
    %20 = vector.broadcast %cst_8 : f32 to vector<56x128xf32>
    %c0_9 = arith.constant 0 : index
    %c0_10 = arith.constant 0 : index
    %c0_11 = arith.constant 0 : index
    %21 = vector.load %arg5[%c0_9, %c0_10, %c0_11] : memref<9x56x56xbf16, #tpu.memory_space<vmem>>, vector<1x56x56xbf16>
    %22 = vector.shape_cast %21 : vector<1x56x56xbf16> to vector<56x56xbf16>
    %cst_12 = arith.constant dense<0.000000e+00> : vector<56x48xf32>
    %23 = tpu.matmul %22, %19, %cst_12 {dimension_numbers = #tpu.dot_dimension_numbers<[1], [0], [0], [1], [0, 0, 1, 1], [], []>} : vector<56x56xbf16>, vector<56x48xbf16>, vector<56x48xf32> -> vector<56x48xf32>
    %24 = arith.truncf %23 : vector<56x48xf32> to vector<56x48xbf16>
    %c0_13 = arith.constant 0 : index
    %c0_14 = arith.constant 0 : index
    %c0_15 = arith.constant 0 : index
    %25 = vector.load %arg4[%c0_13, %c0_14, %c0_15] : memref<9x48x128xbf16, #tpu.memory_space<vmem>>, vector<1x48x128xbf16>
    %26 = vector.shape_cast %25 : vector<1x48x128xbf16> to vector<48x128xbf16>
    %cst_16 = arith.constant dense<0.000000e+00> : vector<56x128xf32>
    %27 = tpu.matmul %24, %26, %cst_16 {dimension_numbers = #tpu.dot_dimension_numbers<[1], [0], [0], [1], [0, 0, 1, 1], [], []>} : vector<56x48xbf16>, vector<48x128xbf16>, vector<56x128xf32> -> vector<56x128xf32>
    %28 = arith.addf %20, %27 : vector<56x128xf32>
    %c1 = arith.constant 1 : index
    %c0_17 = arith.constant 0 : index
    %c0_18 = arith.constant 0 : index
    %29 = vector.load %arg5[%c1, %c0_17, %c0_18] : memref<9x56x56xbf16, #tpu.memory_space<vmem>>, vector<1x56x56xbf16>
    %30 = vector.shape_cast %29 : vector<1x56x56xbf16> to vector<56x56xbf16>
    %cst_19 = arith.constant dense<0.000000e+00> : vector<56x48xf32>
    %31 = tpu.matmul %30, %19, %cst_19 {dimension_numbers = #tpu.dot_dimension_numbers<[1], [0], [0], [1], [0, 0, 1, 1], [], []>} : vector<56x56xbf16>, vector<56x48xbf16>, vector<56x48xf32> -> vector<56x48xf32>
    %32 = arith.truncf %31 : vector<56x48xf32> to vector<56x48xbf16>
    %c1_20 = arith.constant 1 : index
    %c0_21 = arith.constant 0 : index
    %c0_22 = arith.constant 0 : index
    %33 = vector.load %arg4[%c1_20, %c0_21, %c0_22] : memref<9x48x128xbf16, #tpu.memory_space<vmem>>, vector<1x48x128xbf16>
    %34 = vector.shape_cast %33 : vector<1x48x128xbf16> to vector<48x128xbf16>
    %cst_23 = arith.constant dense<0.000000e+00> : vector<56x128xf32>
    %35 = tpu.matmul %32, %34, %cst_23 {dimension_numbers = #tpu.dot_dimension_numbers<[1], [0], [0], [1], [0, 0, 1, 1], [], []>} : vector<56x48xbf16>, vector<48x128xbf16>, vector<56x128xf32> -> vector<56x128xf32>
    %36 = arith.addf %28, %35 : vector<56x128xf32>
    %c2 = arith.constant 2 : index
    %c0_24 = arith.constant 0 : index
    %c0_25 = arith.constant 0 : index
    %37 = vector.load %arg5[%c2, %c0_24, %c0_25] : memref<9x56x56xbf16, #tpu.memory_space<vmem>>, vector<1x56x56xbf16>
    %38 = vector.shape_cast %37 : vector<1x56x56xbf16> to vector<56x56xbf16>
    %cst_26 = arith.constant dense<0.000000e+00> : vector<56x48xf32>
    %39 = tpu.matmul %38, %19, %cst_26 {dimension_numbers = #tpu.dot_dimension_numbers<[1], [0], [0], [1], [0, 0, 1, 1], [], []>} : vector<56x56xbf16>, vector<56x48xbf16>, vector<56x48xf32> -> vector<56x48xf32>
    %40 = arith.truncf %39 : vector<56x48xf32> to vector<56x48xbf16>
    %c2_27 = arith.constant 2 : index
    %c0_28 = arith.constant 0 : index
    %c0_29 = arith.constant 0 : index
    %41 = vector.load %arg4[%c2_27, %c0_28, %c0_29] : memref<9x48x128xbf16, #tpu.memory_space<vmem>>, vector<1x48x128xbf16>
    %42 = vector.shape_cast %41 : vector<1x48x128xbf16> to vector<48x128xbf16>
    %cst_30 = arith.constant dense<0.000000e+00> : vector<56x128xf32>
    %43 = tpu.matmul %40, %42, %cst_30 {dimension_numbers = #tpu.dot_dimension_numbers<[1], [0], [0], [1], [0, 0, 1, 1], [], []>} : vector<56x48xbf16>, vector<48x128xbf16>, vector<56x128xf32> -> vector<56x128xf32>
    %44 = arith.addf %36, %43 : vector<56x128xf32>
    %c3 = arith.constant 3 : index
    %c0_31 = arith.constant 0 : index
    %c0_32 = arith.constant 0 : index
    %45 = vector.load %arg5[%c3, %c0_31, %c0_32] : memref<9x56x56xbf16, #tpu.memory_space<vmem>>, vector<1x56x56xbf16>
    %46 = vector.shape_cast %45 : vector<1x56x56xbf16> to vector<56x56xbf16>
    %cst_33 = arith.constant dense<0.000000e+00> : vector<56x48xf32>
    %47 = tpu.matmul %46, %19, %cst_33 {dimension_numbers = #tpu.dot_dimension_numbers<[1], [0], [0], [1], [0, 0, 1, 1], [], []>} : vector<56x56xbf16>, vector<56x48xbf16>, vector<56x48xf32> -> vector<56x48xf32>
    %48 = arith.truncf %47 : vector<56x48xf32> to vector<56x48xbf16>
    %c3_34 = arith.constant 3 : index
    %c0_35 = arith.constant 0 : index
    %c0_36 = arith.constant 0 : index
    %49 = vector.load %arg4[%c3_34, %c0_35, %c0_36] : memref<9x48x128xbf16, #tpu.memory_space<vmem>>, vector<1x48x128xbf16>
    %50 = vector.shape_cast %49 : vector<1x48x128xbf16> to vector<48x128xbf16>
    %cst_37 = arith.constant dense<0.000000e+00> : vector<56x128xf32>
    %51 = tpu.matmul %48, %50, %cst_37 {dimension_numbers = #tpu.dot_dimension_numbers<[1], [0], [0], [1], [0, 0, 1, 1], [], []>} : vector<56x48xbf16>, vector<48x128xbf16>, vector<56x128xf32> -> vector<56x128xf32>
    %52 = arith.addf %44, %51 : vector<56x128xf32>
    %c4 = arith.constant 4 : index
    %c0_38 = arith.constant 0 : index
    %c0_39 = arith.constant 0 : index
    %53 = vector.load %arg5[%c4, %c0_38, %c0_39] : memref<9x56x56xbf16, #tpu.memory_space<vmem>>, vector<1x56x56xbf16>
    %54 = vector.shape_cast %53 : vector<1x56x56xbf16> to vector<56x56xbf16>
    %cst_40 = arith.constant dense<0.000000e+00> : vector<56x48xf32>
    %55 = tpu.matmul %54, %19, %cst_40 {dimension_numbers = #tpu.dot_dimension_numbers<[1], [0], [0], [1], [0, 0, 1, 1], [], []>} : vector<56x56xbf16>, vector<56x48xbf16>, vector<56x48xf32> -> vector<56x48xf32>
    %56 = arith.truncf %55 : vector<56x48xf32> to vector<56x48xbf16>
    %c4_41 = arith.constant 4 : index
    %c0_42 = arith.constant 0 : index
    %c0_43 = arith.constant 0 : index
    %57 = vector.load %arg4[%c4_41, %c0_42, %c0_43] : memref<9x48x128xbf16, #tpu.memory_space<vmem>>, vector<1x48x128xbf16>
    %58 = vector.shape_cast %57 : vector<1x48x128xbf16> to vector<48x128xbf16>
    %cst_44 = arith.constant dense<0.000000e+00> : vector<56x128xf32>
    %59 = tpu.matmul %56, %58, %cst_44 {dimension_numbers = #tpu.dot_dimension_numbers<[1], [0], [0], [1], [0, 0, 1, 1], [], []>} : vector<56x48xbf16>, vector<48x128xbf16>, vector<56x128xf32> -> vector<56x128xf32>
    %60 = arith.addf %52, %59 : vector<56x128xf32>
    %c5 = arith.constant 5 : index
    %c0_45 = arith.constant 0 : index
    %c0_46 = arith.constant 0 : index
    %61 = vector.load %arg5[%c5, %c0_45, %c0_46] : memref<9x56x56xbf16, #tpu.memory_space<vmem>>, vector<1x56x56xbf16>
    %62 = vector.shape_cast %61 : vector<1x56x56xbf16> to vector<56x56xbf16>
    %cst_47 = arith.constant dense<0.000000e+00> : vector<56x48xf32>
    %63 = tpu.matmul %62, %19, %cst_47 {dimension_numbers = #tpu.dot_dimension_numbers<[1], [0], [0], [1], [0, 0, 1, 1], [], []>} : vector<56x56xbf16>, vector<56x48xbf16>, vector<56x48xf32> -> vector<56x48xf32>
    %64 = arith.truncf %63 : vector<56x48xf32> to vector<56x48xbf16>
    %c5_48 = arith.constant 5 : index
    %c0_49 = arith.constant 0 : index
    %c0_50 = arith.constant 0 : index
    %65 = vector.load %arg4[%c5_48, %c0_49, %c0_50] : memref<9x48x128xbf16, #tpu.memory_space<vmem>>, vector<1x48x128xbf16>
    %66 = vector.shape_cast %65 : vector<1x48x128xbf16> to vector<48x128xbf16>
    %cst_51 = arith.constant dense<0.000000e+00> : vector<56x128xf32>
    %67 = tpu.matmul %64, %66, %cst_51 {dimension_numbers = #tpu.dot_dimension_numbers<[1], [0], [0], [1], [0, 0, 1, 1], [], []>} : vector<56x48xbf16>, vector<48x128xbf16>, vector<56x128xf32> -> vector<56x128xf32>
    %68 = arith.addf %60, %67 : vector<56x128xf32>
    %c6 = arith.constant 6 : index
    %c0_52 = arith.constant 0 : index
    %c0_53 = arith.constant 0 : index
    %69 = vector.load %arg5[%c6, %c0_52, %c0_53] : memref<9x56x56xbf16, #tpu.memory_space<vmem>>, vector<1x56x56xbf16>
    %70 = vector.shape_cast %69 : vector<1x56x56xbf16> to vector<56x56xbf16>
    %cst_54 = arith.constant dense<0.000000e+00> : vector<56x48xf32>
    %71 = tpu.matmul %70, %19, %cst_54 {dimension_numbers = #tpu.dot_dimension_numbers<[1], [0], [0], [1], [0, 0, 1, 1], [], []>} : vector<56x56xbf16>, vector<56x48xbf16>, vector<56x48xf32> -> vector<56x48xf32>
    %72 = arith.truncf %71 : vector<56x48xf32> to vector<56x48xbf16>
    %c6_55 = arith.constant 6 : index
    %c0_56 = arith.constant 0 : index
    %c0_57 = arith.constant 0 : index
    %73 = vector.load %arg4[%c6_55, %c0_56, %c0_57] : memref<9x48x128xbf16, #tpu.memory_space<vmem>>, vector<1x48x128xbf16>
    %74 = vector.shape_cast %73 : vector<1x48x128xbf16> to vector<48x128xbf16>
    %cst_58 = arith.constant dense<0.000000e+00> : vector<56x128xf32>
    %75 = tpu.matmul %72, %74, %cst_58 {dimension_numbers = #tpu.dot_dimension_numbers<[1], [0], [0], [1], [0, 0, 1, 1], [], []>} : vector<56x48xbf16>, vector<48x128xbf16>, vector<56x128xf32> -> vector<56x128xf32>
    %76 = arith.addf %68, %75 : vector<56x128xf32>
    %c7 = arith.constant 7 : index
    %c0_59 = arith.constant 0 : index
    %c0_60 = arith.constant 0 : index
    %77 = vector.load %arg5[%c7, %c0_59, %c0_60] : memref<9x56x56xbf16, #tpu.memory_space<vmem>>, vector<1x56x56xbf16>
    %78 = vector.shape_cast %77 : vector<1x56x56xbf16> to vector<56x56xbf16>
    %cst_61 = arith.constant dense<0.000000e+00> : vector<56x48xf32>
    %79 = tpu.matmul %78, %19, %cst_61 {dimension_numbers = #tpu.dot_dimension_numbers<[1], [0], [0], [1], [0, 0, 1, 1], [], []>} : vector<56x56xbf16>, vector<56x48xbf16>, vector<56x48xf32> -> vector<56x48xf32>
    %80 = arith.truncf %79 : vector<56x48xf32> to vector<56x48xbf16>
    %c7_62 = arith.constant 7 : index
    %c0_63 = arith.constant 0 : index
    %c0_64 = arith.constant 0 : index
    %81 = vector.load %arg4[%c7_62, %c0_63, %c0_64] : memref<9x48x128xbf16, #tpu.memory_space<vmem>>, vector<1x48x128xbf16>
    %82 = vector.shape_cast %81 : vector<1x48x128xbf16> to vector<48x128xbf16>
    %cst_65 = arith.constant dense<0.000000e+00> : vector<56x128xf32>
    %83 = tpu.matmul %80, %82, %cst_65 {dimension_numbers = #tpu.dot_dimension_numbers<[1], [0], [0], [1], [0, 0, 1, 1], [], []>} : vector<56x48xbf16>, vector<48x128xbf16>, vector<56x128xf32> -> vector<56x128xf32>
    %84 = arith.addf %76, %83 : vector<56x128xf32>
    %c8 = arith.constant 8 : index
    %c0_66 = arith.constant 0 : index
    %c0_67 = arith.constant 0 : index
    %85 = vector.load %arg5[%c8, %c0_66, %c0_67] : memref<9x56x56xbf16, #tpu.memory_space<vmem>>, vector<1x56x56xbf16>
    %86 = vector.shape_cast %85 : vector<1x56x56xbf16> to vector<56x56xbf16>
    %cst_68 = arith.constant dense<0.000000e+00> : vector<56x48xf32>
    %87 = tpu.matmul %86, %19, %cst_68 {dimension_numbers = #tpu.dot_dimension_numbers<[1], [0], [0], [1], [0, 0, 1, 1], [], []>} : vector<56x56xbf16>, vector<56x48xbf16>, vector<56x48xf32> -> vector<56x48xf32>
    %88 = arith.truncf %87 : vector<56x48xf32> to vector<56x48xbf16>
    %c8_69 = arith.constant 8 : index
    %c0_70 = arith.constant 0 : index
    %c0_71 = arith.constant 0 : index
    %89 = vector.load %arg4[%c8_69, %c0_70, %c0_71] : memref<9x48x128xbf16, #tpu.memory_space<vmem>>, vector<1x48x128xbf16>
    %90 = vector.shape_cast %89 : vector<1x48x128xbf16> to vector<48x128xbf16>
    %cst_72 = arith.constant dense<0.000000e+00> : vector<56x128xf32>
    %91 = tpu.matmul %88, %90, %cst_72 {dimension_numbers = #tpu.dot_dimension_numbers<[1], [0], [0], [1], [0, 0, 1, 1], [], []>} : vector<56x48xbf16>, vector<48x128xbf16>, vector<56x128xf32> -> vector<56x128xf32>
    %92 = arith.addf %84, %91 : vector<56x128xf32>
    %c0_73 = arith.constant 0 : index
    %c0_74 = arith.constant 0 : index
    %93 = vector.load %arg6[%c0_73, %c0_74] : memref<1x128xf32, #tpu.memory_space<vmem>>, vector<1x128xf32>
    %94 = vector.broadcast %93 : vector<1x128xf32> to vector<56x128xf32>
    %95 = arith.addf %92, %94 : vector<56x128xf32>
    %cst_75 = arith.constant 0.000000e+00 : f32
    %96 = vector.broadcast %cst_75 : f32 to vector<56x128xf32>
    %97 = arith.cmpf oge, %95, %96 : vector<56x128xf32>
    %cst_76 = arith.constant 1.000000e-01 : f32
    %98 = vector.broadcast %cst_76 : f32 to vector<56x128xf32>
    %99 = arith.mulf %98, %95 : vector<56x128xf32>
    %100 = arith.select %97, %95, %99 : vector<56x128xi1>, vector<56x128xf32>
    %c0_77 = arith.constant 0 : index
    %c0_78 = arith.constant 0 : index
    %101 = vector.load %arg7[%c0_77, %c0_78] : memref<56x128xf32, #tpu.memory_space<vmem>>, vector<56x128xf32>
    %102 = arith.mulf %100, %101 : vector<56x128xf32>
    %cst_79 = arith.constant dense<0.000000e+00> : vector<128xf32>
    %103 = vector.multi_reduction <add>, %102, %cst_79 [0] : vector<56x128xf32> to vector<128xf32>
    %104 = vector.shape_cast %103 : vector<128xf32> to vector<1x128xf32>
    %c0_80 = arith.constant 0 : index
    %c0_81 = arith.constant 0 : index
    %c0_82 = arith.constant 0 : index
    %105 = vector.load %arg8[%c0_80, %c0_81, %c0_82] : memref<1x1x128xf32, #tpu.memory_space<vmem>>, vector<1x1x128xf32>
    %106 = vector.shape_cast %105 : vector<1x1x128xf32> to vector<1x128xf32>
    %107 = vector.shape_cast %104 : vector<1x128xf32> to vector<1x1x128xf32>
    tpu.vector_store %arg8[%c0_80, %c0_81, %c0_82], %107 {strides = array<i32>} : memref<1x1x128xf32, #tpu.memory_space<vmem>>, vector<1x1x128xf32>,
    return
  }
  func.func @transform_0(%arg0: i32) -> (i32, i32, i32) {
    %c0_i32 = arith.constant 0 : i32
    %c0_i32_0 = arith.constant 0 : i32
    %c0_i32_1 = arith.constant 0 : i32
    return %arg0, %c0_i32, %c0_i32_0 : i32, i32, i32
  }
  func.func @transform_1(%arg0: i32) -> (i32, i32) {
    %c0_i32 = arith.constant 0 : i32
    %c0_i32_0 = arith.constant 0 : i32
    %c0_i32_1 = arith.constant 0 : i32
    return %c0_i32, %c0_i32_0 : i32, i32
  }
  func.func @transform_2(%arg0: i32) -> (i32, i32) {
    %c0_i32 = arith.constant 0 : i32
    %c0_i32_0 = arith.constant 0 : i32
    %c0_i32_1 = arith.constant 0 : i32
    return %c0_i32, %c0_i32_0 : i32, i32
  }
  func.func @transform_3(%arg0: i32) -> (i32, i32, i32) {
    %c0_i32 = arith.constant 0 : i32
    %c0_i32_0 = arith.constant 0 : i32
    %c0_i32_1 = arith.constant 0 : i32
    %c0_i32_2 = arith.constant 0 : i32
    return %c0_i32, %c0_i32_0, %c0_i32_1 : i32, i32, i32
  }
  func.func @transform_4(%arg0: i32) -> (i32, i32, i32) {
    %c0_i32 = arith.constant 0 : i32
    %c0_i32_0 = arith.constant 0 : i32
    %c0_i32_1 = arith.constant 0 : i32
    %c0_i32_2 = arith.constant 0 : i32
    return %c0_i32, %c0_i32_0, %c0_i32_1 : i32, i32, i32
  }
  func.func @transform_5(%arg0: i32) -> (i32, i32) {
    %c0_i32 = arith.constant 0 : i32
    %c0_i32_0 = arith.constant 0 : i32
    %c0_i32_1 = arith.constant 0 : i32
    return %c0_i32, %c0_i32_0 : i32, i32
  }
  func.func @transform_6(%arg0: i32) -> (i32, i32) {
    %c0_i32 = arith.constant 0 : i32
    %c0_i32_0 = arith.constant 0 : i32
    %c0_i32_1 = arith.constant 0 : i32
    return %c0_i32, %c0_i32_0 : i32, i32
  }
  func.func @transform_7(%arg0: i32) -> (i32, i32, i32) {
    %c0_i32 = arith.constant 0 : i32
    %c0_i32_0 = arith.constant 0 : i32
    %c0_i32_1 = arith.constant 0 : i32
    return %arg0, %c0_i32, %c0_i32_0 : i32, i32, i32
  }
}

</mosaic_0001>

<llo_original>
// kernel: two_layer_cnn_pro_forward.1
$region0: #{two_layer_cnn_pro_forward.1}
  #allocation0 [shape = 'u32[]', space=smem, size = 0x4, offset = 0x4, fixed_abs, tag = 'smem constant byte address 0x4 - core index']
  #allocation1 [shape = 'u32[144,128]{1,0:T(1,128)}', space=vmem, size = 0x12000, scoped, tag = 'internal scratch']
  %s0 = inlined_call_operand.vmem [shape: bf16[2,224,33], index: 0, kind: input, shape index: {}]
  %s1 = inlined_call_operand.vmem [shape: bf16[33,48], index: 1, kind: input, shape index: {}]
  %s2 = inlined_call_operand.vmem [shape: f32[1,48], index: 2, kind: input, shape index: {}]
  %s3 = inlined_call_operand.vmem [shape: bf16[9,48,128], index: 3, kind: input, shape index: {}]
  %s4 = inlined_call_operand.vmem [shape: bf16[9,56,56], index: 4, kind: input, shape index: {}]
  %s5 = inlined_call_operand.vmem [shape: f32[1,128], index: 5, kind: input, shape index: {}]
  %s6 = inlined_call_operand.vmem [shape: f32[56,128], index: 6, kind: input, shape index: {}]
  %s7 = inlined_call_operand.vmem [shape: f32[2,1,128], index: 7, kind: output, shape index: {}]
  %s8 = sld [smem:[#allocation0]]
  $region61: #{two_layer_cnn_pro_forward.1} parent=0
    _
  %s10 = ssub.s32 1, %s8
  %s11 = scalar_select 0, %s10, %s8
  loop: start=0, step=1, limit=4
  $region2: #{two_layer_cnn_pro_forward.1} parent=0 // loop_pre_header
    _
  $region3: #{two_layer_cnn_pro_forward.1} parent=0 // loop_header
    %s13 = sphi 0, %s17
    %p14 = scmp.ge.s32.totalorder %s13, 4
    %s23 = sphi 0, %s25
    %s26 = sphi 0, %s23
    %s27 = sphi 0, %s26
    %s43 = sphi 0, %s27
    %s47 = sphi 0, %s47
    %s49 = sphi 0, %s47
    %s50 = sphi 0, %s49
    %s64 = sphi 0, %s50
    %s68 = sphi 0, %s68
    %s70 = sphi 0, %s68
    %s71 = sphi 0, %s70
    %s85 = sphi 0, %s71
    %s89 = sphi 0, %s89
    %s91 = sphi 0, %s89
    %s92 = sphi 0, %s91
    %s106 = sphi 0, %s92
    %s110 = sphi 0, %s110
    %s112 = sphi 0, %s110
    %s113 = sphi 0, %s112
    %s127 = sphi 0, %s113
    %s131 = sphi 0, %s131
    %s133 = sphi 0, %s131
    %s134 = sphi 0, %s133
    %s148 = sphi 0, %s134
    %s152 = sphi 0, %s152
    %s154 = sphi 0, %s152
    %s155 = sphi 0, %s154
    %s169 = sphi 0, %s155
    %s175 = sphi 0, %s177
    %s178 = sphi 0, %s175
    %s179 = sphi 0, %s178
    %s195 = sphi 0, %s179
  $region4: #{two_layer_cnn_pro_forward.1} parent=0 // loop_header_branch
    %16 = sbr.rel (%p14) target = $region8
  $region5: #{two_layer_cnn_pro_forward.1} parent=0 // loop_body
    %s18 = ssub.s32 %s13, 1
    %s19 = ssub.s32 %s13, 2
    %s20 = sadd.s32 %s13, 1
    %s21 = ssub.s32 %s13, %s20
    %p22 = scmp.eq.s32.totalorder %s21, 0
    %s24 = sadd.s32 %s23, 1
    %s25 = scalar_select %p22, %s23, %s24
    %p28 = pneg %p22
    %p29 = scmp.eq.s32.totalorder %s13, 1
    %p30 = por %p28, %p29
    %p31 = scmp.ne.s32.totalorder %s23, %s26
    %p32 = scmp.eq.s32.totalorder %s13, 0
    %p33 = por %p31, %p32
    %p34 = scmp.ne.s32.totalorder %s23, %s26
    %p35 = scmp.eq.s32.totalorder %s18, 1
    %p36 = por %p34, %p35
    %p37 = scmp.ne.s32.totalorder %s26, %s27
    %p38 = scmp.eq.s32.totalorder %s18, 0
    %p39 = por %p37, %p38
    %p40 = scmp.ne.s32.totalorder %s26, %s27
    %p41 = scmp.eq.s32.totalorder %s19, 1
    %p42 = por %p40, %p41
    %p44 = scmp.ne.s32.totalorder %s27, %s43
    %p45 = scmp.eq.s32.totalorder %s19, 0
    %p46 = por %p44, %p45
    %s48 = sadd.s32 %s47, 1
    %p51 = scmp.eq.s32.totalorder %s13, 1
    %p52 = scmp.ne.s32.totalorder %s47, %s49
    %p53 = scmp.eq.s32.totalorder %s13, 0
    %p54 = por %p52, %p53
    %p55 = scmp.ne.s32.totalorder %s47, %s49
    %p56 = scmp.eq.s32.totalorder %s18, 1
    %p57 = por %p55, %p56
    %p58 = scmp.ne.s32.totalorder %s49, %s50
    %p59 = scmp.eq.s32.totalorder %s18, 0
    %p60 = por %p58, %p59
    %p61 = scmp.ne.s32.totalorder %s49, %s50
    %p62 = scmp.eq.s32.totalorder %s19, 1
    %p63 = por %p61, %p62
    %p65 = scmp.ne.s32.totalorder %s50, %s64
    %p66 = scmp.eq.s32.totalorder %s19, 0
    %p67 = por %p65, %p66
    %s69 = sadd.s32 %s68, 1
    %p72 = scmp.eq.s32.totalorder %s13, 1
    %p73 = scmp.ne.s32.totalorder %s68, %s70
    %p74 = scmp.eq.s32.totalorder %s13, 0
    %p75 = por %p73, %p74
    %p76 = scmp.ne.s32.totalorder %s68, %s70
    %p77 = scmp.eq.s32.totalorder %s18, 1
    %p78 = por %p76, %p77
    %p79 = scmp.ne.s32.totalorder %s70, %s71
    %p80 = scmp.eq.s32.totalorder %s18, 0
    %p81 = por %p79, %p80
    %p82 = scmp.ne.s32.totalorder %s70, %s71
    %p83 = scmp.eq.s32.totalorder %s19, 1
    %p84 = por %p82, %p83
    %p86 = scmp.ne.s32.totalorder %s71, %s85
    %p87 = scmp.eq.s32.totalorder %s19, 0
    %p88 = por %p86, %p87
    %s90 = sadd.s32 %s89, 1
    %p93 = scmp.eq.s32.totalorder %s13, 1
    %p94 = scmp.ne.s32.totalorder %s89, %s91
    %p95 = scmp.eq.s32.totalorder %s13, 0
    %p96 = por %p94, %p95
    %p97 = scmp.ne.s32.totalorder %s89, %s91
    %p98 = scmp.eq.s32.totalorder %s18, 1
    %p99 = por %p97, %p98
    %p100 = scmp.ne.s32.totalorder %s91, %s92
    %p101 = scmp.eq.s32.totalorder %s18, 0
    %p102 = por %p100, %p101
    %p103 = scmp.ne.s32.totalorder %s91, %s92
    %p104 = scmp.eq.s32.totalorder %s19, 1
    %p105 = por %p103, %p104
    %p107 = scmp.ne.s32.totalorder %s92, %s106
    %p108 = scmp.eq.s32.totalorder %s19, 0
    %p109 = por %p107, %p108
    %s111 = sadd.s32 %s110, 1
    %p114 = scmp.eq.s32.totalorder %s13, 1
    %p115 = scmp.ne.s32.totalorder %s110, %s112
    %p116 = scmp.eq.s32.totalorder %s13, 0
    %p117 = por %p115, %p116
    %p118 = scmp.ne.s32.totalorder %s110, %s112
    %p119 = scmp.eq.s32.totalorder %s18, 1
    %p120 = por %p118, %p119
    %p121 = scmp.ne.s32.totalorder %s112, %s113
    %p122 = scmp.eq.s32.totalorder %s18, 0
    %p123 = por %p121, %p122
    %p124 = scmp.ne.s32.totalorder %s112, %s113
    %p125 = scmp.eq.s32.totalorder %s19, 1
    %p126 = por %p124, %p125
    %p128 = scmp.ne.s32.totalorder %s113, %s127
    %p129 = scmp.eq.s32.totalorder %s19, 0
    %p130 = por %p128, %p129
    %s132 = sadd.s32 %s131, 1
    %p135 = scmp.eq.s32.totalorder %s13, 1
    %p136 = scmp.ne.s32.totalorder %s131, %s133
    %p137 = scmp.eq.s32.totalorder %s13, 0
    %p138 = por %p136, %p137
    %p139 = scmp.ne.s32.totalorder %s131, %s133
    %p140 = scmp.eq.s32.totalorder %s18, 1
    %p141 = por %p139, %p140
    %p142 = scmp.ne.s32.totalorder %s133, %s134
    %p143 = scmp.eq.s32.totalorder %s18, 0
    %p144 = por %p142, %p143
    %p145 = scmp.ne.s32.totalorder %s133, %s134
    %p146 = scmp.eq.s32.totalorder %s19, 1
    %p147 = por %p145, %p146
    %p149 = scmp.ne.s32.totalorder %s134, %s148
    %p150 = scmp.eq.s32.totalorder %s19, 0
    %p151 = por %p149, %p150
    %s153 = sadd.s32 %s152, 1
    %p156 = scmp.eq.s32.totalorder %s13, 1
    %p157 = scmp.ne.s32.totalorder %s152, %s154
    %p158 = scmp.eq.s32.totalorder %s13, 0
    %p159 = por %p157, %p158
    %p160 = scmp.ne.s32.totalorder %s152, %s154
    %p161 = scmp.eq.s32.totalorder %s18, 1
    %p162 = por %p160, %p161
    %p163 = scmp.ne.s32.totalorder %s154, %s155
    %p164 = scmp.eq.s32.totalorder %s18, 0
    %p165 = por %p163, %p164
    %p166 = scmp.ne.s32.totalorder %s154, %s155
    %p167 = scmp.eq.s32.totalorder %s19, 1
    %p168 = por %p166, %p167
    %p170 = scmp.ne.s32.totalorder %s155, %s169
    %p171 = scmp.eq.s32.totalorder %s19, 0
    %p172 = por %p170, %p171
    %s173 = ssub.s32 %s13, %s20
    %p174 = scmp.eq.s32.totalorder %s173, 0
    %s176 = sadd.s32 %s175, 1
    %s177 = scalar_select %p174, %s175, %s176
    %p180 = pneg %p174
    %p181 = scmp.eq.s32.totalorder %s13, 1
    %p182 = por %p180, %p181
    %p183 = scmp.ne.s32.totalorder %s175, %s178
    %p184 = scmp.eq.s32.totalorder %s13, 0
    %p185 = por %p183, %p184
    %p186 = scmp.ne.s32.totalorder %s175, %s178
    %p187 = scmp.eq.s32.totalorder %s18, 1
    %p188 = por %p186, %p187
    %p189 = scmp.ne.s32.totalorder %s178, %s179
    %p190 = scmp.eq.s32.totalorder %s18, 0
    %p191 = por %p189, %p190
    %p192 = scmp.ne.s32.totalorder %s178, %s179
    %p193 = scmp.eq.s32.totalorder %s19, 1
    %p194 = por %p192, %p193
    %p196 = scmp.ne.s32.totalorder %s179, %s195
    %p197 = scmp.eq.s32.totalorder %s19, 0
    %p198 = por %p196, %p197
    %p199 = scmp.le.s32.totalorder 1, %s13
    %p200 = scmp.lt.s32.totalorder %s13, 3
    %p201 = pnand %p199, %p200
    %p202 = pneg %p201
    // Predicated region
    $region9: #{two_layer_cnn_pro_forward.1} parent=5 // pred_check
      _
    $region10: #{two_layer_cnn_pro_forward.1} parent=5 // pred_check_branch
      %204 = sbr.rel (%p201) target = $region12
    $region11: #{two_layer_cnn_pro_forward.1} parent=5 // pred_region
      %s205 = ssub.s32 %s13, 1
      // Predicated region
      $region13: #{two_layer_cnn_pro_forward.1} parent=11 // pred_check
        %p206 = pneg %p60
      $region14: #{two_layer_cnn_pro_forward.1} parent=11 // pred_check_branch
        %208 = sbr.rel (%p206) target = $region16
      $region15: #{two_layer_cnn_pro_forward.1} parent=11 // pred_region
        _
      $region16: #{two_layer_cnn_pro_forward.1} parent=11 // pred_fallthru
        _
      // Predicated region
      $region17: #{two_layer_cnn_pro_forward.1} parent=11 // pred_check
        %p209 = pneg %p81
      $region18: #{two_layer_cnn_pro_forward.1} parent=11 // pred_check_branch
        %211 = sbr.rel (%p209) target = $region20
      $region19: #{two_layer_cnn_pro_forward.1} parent=11 // pred_region
        _
      $region20: #{two_layer_cnn_pro_forward.1} parent=11 // pred_fallthru
        _
      // Predicated region
      $region21: #{two_layer_cnn_pro_forward.1} parent=11 // pred_check
        %p212 = pneg %p102
      $region22: #{two_layer_cnn_pro_forward.1} parent=11 // pred_check_branch
        %214 = sbr.rel (%p212) target = $region24
      $region23: #{two_layer_cnn_pro_forward.1} parent=11 // pred_region
        _
      $region24: #{two_layer_cnn_pro_forward.1} parent=11 // pred_fallthru
        _
      // Predicated region
      $region25: #{two_layer_cnn_pro_forward.1} parent=11 // pred_check
        %p215 = pneg %p123
      $region26: #{two_layer_cnn_pro_forward.1} parent=11 // pred_check_branch
        %217 = sbr.rel (%p215) target = $region28
      $region27: #{two_layer_cnn_pro_forward.1} parent=11 // pred_region
        _
      $region28: #{two_layer_cnn_pro_forward.1} parent=11 // pred_fallthru
        _
      // Predicated region
      $region29: #{two_layer_cnn_pro_forward.1} parent=11 // pred_check
        %p218 = pneg %p144
      $region30: #{two_layer_cnn_pro_forward.1} parent=11 // pred_check_branch
        %220 = sbr.rel (%p218) target = $region32
      $region31: #{two_layer_cnn_pro_forward.1} parent=11 // pred_region
        _
      $region32: #{two_layer_cnn_pro_forward.1} parent=11 // pred_fallthru
        _
      // Predicated region
      $region33: #{two_layer_cnn_pro_forward.1} parent=11 // pred_check
        %p221 = pneg %p165
      $region34: #{two_layer_cnn_pro_forward.1} parent=11 // pred_check_branch
        %223 = sbr.rel (%p221) target = $region36
      $region35: #{two_layer_cnn_pro_forward.1} parent=11 // pred_region
        _
      $region36: #{two_layer_cnn_pro_forward.1} parent=11 // pred_fallthru
        _
    $region12: #{two_layer_cnn_pro_forward.1} parent=5 // pred_fallthru
      _
    %p224 = scmp.lt.s32.totalorder %s13, 2
    // Predicated region
    $region37: #{two_layer_cnn_pro_forward.1} parent=5 // pred_check
      %p225 = pneg %p224
    $region38: #{two_layer_cnn_pro_forward.1} parent=5 // pred_check_branch
      %227 = sbr.rel (%p225) target = $region40
    $region39: #{two_layer_cnn_pro_forward.1} parent=5 // pred_region
      // Predicated region
      $region41: #{two_layer_cnn_pro_forward.1} parent=39 // pred_check
        %p228 = pneg %p33
      $region42: #{two_layer_cnn_pro_forward.1} parent=39 // pred_check_branch
        %230 = sbr.rel (%p228) target = $region44
      $region43: #{two_layer_cnn_pro_forward.1} parent=39 // pred_region
        %p231 = scmp.lt.s32.totalorder %s13, 1
        %s232 = scalar_select %p231, %s13, 1
        %s233 = smul.addr %s232, 28
        %s234 = smul.addr %s233, 4
        %s235 = scalar_lea.vmem %s0, %s234
      $region44: #{two_layer_cnn_pro_forward.1} parent=39 // pred_fallthru
        _
    $region40: #{two_layer_cnn_pro_forward.1} parent=5 // pred_fallthru
      _
    %p236 = scmp.le.s32.totalorder 1, %s13
    %p237 = scmp.lt.s32.totalorder %s13, 3
    %p238 = pnand %p236, %p237
    %p239 = pneg %p238
    // Predicated region
    $region45: #{two_layer_cnn_pro_forward.1} parent=5 // pred_check
      _
    $region46: #{two_layer_cnn_pro_forward.1} parent=5 // pred_check_branch
      %241 = sbr.rel (%p238) target = $region48
    $region47: #{two_layer_cnn_pro_forward.1} parent=5 // pred_region
      %s242 = ssub.s32 %s13, 1
      %p243 = scmp.lt.s32.totalorder %s18, 1
      %s244 = scalar_select %p243, %s18, 1
      %s245 = smul.addr %s244, 28
      %s246 = smul.addr %s245, 4
      %s247 = scalar_lea.vmem %s0, %s246
      %p248 = pneg %p39
      %p249 = pneg %p36
      %p250 = pneg %p60
      %p251 = pneg %p57
      %p252 = pneg %p81
      %p253 = pneg %p78
      %p254 = pneg %p102
      %p255 = pneg %p99
      %p256 = pneg %p123
      %p257 = pneg %p120
      %p258 = pneg %p144
      %p259 = pneg %p141
      %p260 = pneg %p165
      %p261 = pneg %p162
      %p262 = pneg %p191
      %p263 = pneg %p188
      %p264 = scmp.lt.s32.totalorder %s18, 1
      %s265 = scalar_select %p264, %s18, 1
      %s266 = scalar_lea.vmem %s7, %s265
      %p267 = scmp.lt.s32.totalorder %s18, 1
      %s268 = scalar_select %p267, %s18, 1
      %s269 = smul.addr %s268, 28
      %s270 = smul.addr %s269, 4
      %s271 = scalar_lea.vmem %s0, %s270
      %p272 = scmp.lt.s32.totalorder %s18, 1
      %s273 = scalar_select %p272, %s18, 1
      %s274 = scalar_lea.vmem %s7, %s273
      %v276 = vld [vmem:[%s1] sm:$0xf]
      %v277 = vld [vmem:[%s1 + $0x4] sm:$0xf]
      %v278 = vld [vmem:[%s1 + $0x8] sm:$0xf]
      %v279 = vld [vmem:[%s1 + $0xc] sm:$0xf]
      %v280 = vld [vmem:[%s1 + $0x10] sm:$0x1]
      %v281 = vld [vmem:[%s271] sm:$0xf]
      %v282 = vld [vmem:[%s271 + $0x4] sm:$0xf]
      %v283 = vld [vmem:[%s271 + $0x8] sm:$0xf]
      %v284 = vld [vmem:[%s271 + $0xc] sm:$0xf]
      %v285 = vld [vmem:[%s271 + $0x10] sm:$0xf]
      %v286 = vld [vmem:[%s271 + $0x14] sm:$0xf]
      %v287 = vld [vmem:[%s271 + $0x18] sm:$0xf]
      %v288 = vld [vmem:[%s271 + $0x1c] sm:$0xf]
      %v289 = vld [vmem:[%s271 + $0x20] sm:$0xf]
      %v290 = vld [vmem:[%s271 + $0x24] sm:$0xf]
      %v291 = vld [vmem:[%s271 + $0x28] sm:$0xf]
      %v292 = vld [vmem:[%s271 + $0x2c] sm:$0xf]
      %v293 = vld [vmem:[%s271 + $0x30] sm:$0xf]
      %v294 = vld [vmem:[%s271 + $0x34] sm:$0xf]
      %v295 = vld [vmem:[%s271 + $0x38] sm:$0xf]
      %v296 = vld [vmem:[%s271 + $0x3c] sm:$0xf]
      %v297 = vld [vmem:[%s271 + $0x40] sm:$0xf]
      %v298 = vld [vmem:[%s271 + $0x44] sm:$0xf]
      %v299 = vld [vmem:[%s271 + $0x48] sm:$0xf]
      %v300 = vld [vmem:[%s271 + $0x4c] sm:$0xf]
      %v301 = vld [vmem:[%s271 + $0x50] sm:$0xf]
      %v302 = vld [vmem:[%s271 + $0x54] sm:$0xf]
      %v303 = vld [vmem:[%s271 + $0x58] sm:$0xf]
      %v304 = vld [vmem:[%s271 + $0x5c] sm:$0xf]
      %v305 = vld [vmem:[%s271 + $0x60] sm:$0xf]
      %v306 = vld [vmem:[%s271 + $0x64] sm:$0xf]
      %v307 = vld [vmem:[%s271 + $0x68] sm:$0xf]
      %v308 = vld [vmem:[%s271 + $0x6c] sm:$0xf]
      %v337 = vunpack.c.l.b16 %v281
      %v338 = vunpack.c.l.b16 %v282
      %v339 = vunpack.c.l.b16 %v283
      %v340 = vunpack.c.l.b16 %v284
      %v341 = vunpack.c.l.b16 %v285
      %v342 = vunpack.c.l.b16 %v286
      %v343 = vunpack.c.l.b16 %v287
      %v344 = vunpack.c.l.b16 %v288
      %v345 = vunpack.c.l.b16 %v289
      %v346 = vunpack.c.l.b16 %v290
      %v347 = vunpack.c.l.b16 %v291
      %v348 = vunpack.c.l.b16 %v292
      %v349 = vunpack.c.l.b16 %v293
      %v350 = vunpack.c.l.b16 %v294
      %v351 = vunpack.c.l.b16 %v295
      %v352 = vunpack.c.l.b16 %v296
      %v353 = vunpack.c.l.b16 %v297
      %v354 = vunpack.c.l.b16 %v298
      %v355 = vunpack.c.l.b16 %v299
      %v356 = vunpack.c.l.b16 %v300
      %v357 = vunpack.c.l.b16 %v301
      %v358 = vunpack.c.l.b16 %v302
      %v359 = vunpack.c.l.b16 %v303
      %v360 = vunpack.c.l.b16 %v304
      %v361 = vunpack.c.l.b16 %v305
      %v362 = vunpack.c.l.b16 %v306
      %v363 = vunpack.c.l.b16 %v307
      %v364 = vunpack.c.l.b16 %v308
      %v365 = vpack.c.b16 %v338, %v337
      %v366 = vpack.c.b16 %v340, %v339
      %v367 = vpack.c.b16 %v342, %v341
      %v368 = vpack.c.b16 %v344, %v343
      %v369 = vpack.c.b16 %v346, %v345
      %v370 = vpack.c.b16 %v348, %v347
      %v371 = vpack.c.b16 %v350, %v349
      %v372 = vpack.c.b16 %v352, %v351
      %v373 = vpack.c.b16 %v354, %v353
      %v374 = vpack.c.b16 %v356, %v355
      %v375 = vpack.c.b16 %v358, %v357
      %v376 = vpack.c.b16 %v360, %v359
      %v377 = vpack.c.b16 %v362, %v361
      %v378 = vpack.c.b16 %v364, %v363
      %v384 = vunpack.c.l.b16 %v276
      %v385 = vunpack.c.l.b16 %v277
      %v386 = vunpack.c.l.b16 %v278
      %v387 = vunpack.c.l.b16 %v279
      %v388 = vunpack.c.l.b16 %v280
      %v389 = vpack.c.b16 %v385, %v384
      %v390 = vpack.c.b16 %v387, %v386
      %v391 = vpack.c.b16 %v388, %v388
      %vm394 = vcmask 269312
      %v396 = vsel %vm394, %v365, 0
      %v399 = vsel %vm394, %v366, 0
      %v402 = vsel %vm394, %v367, 0
      %v405 = vsel %vm394, %v368, 0
      %v408 = vsel %vm394, %v369, 0
      %v411 = vsel %vm394, %v370, 0
      %v414 = vsel %vm394, %v371, 0
      %v417 = vsel %vm394, %v372, 0
      %v420 = vsel %vm394, %v373, 0
      %v423 = vsel %vm394, %v374, 0
      %v426 = vsel %vm394, %v375, 0
      %v429 = vsel %vm394, %v376, 0
      %v432 = vsel %vm394, %v377, 0
      %v435 = vsel %vm394, %v378, 0
      %vm437 = vcmask 1040384
      %v438 = vsel 0, 4294967295, 65535
      %v439 = vsel %vm437, %v438, 0
      %v441 = vand.u32 %v391, %v439
      %443 = vmatprep.subr.bf16.mxu0 0
      %444 = vmatpush1.bf16.msra.mxu0 %v389
      %445 = vmatprep.subr.bf16.mxu0 0
      %446 = vmatpush1.bf16.msra.mxu0 %v390
      %447 = vmatprep.subr.bf16.mxu0 0
      %448 = vmatpush1.bf16.msra.mxu0 %v441
      %449 = vmatprep.subr.bf16.mxu0 0
      %450 = vmatpush1.bf16.msra.mxu0 0
      %451 = vmatprep.subr.bf16.mxu0 0
      %452 = vmatpush1.bf16.msra.mxu0 0
      %453 = vmatprep.subr.bf16.mxu0 0
      %454 = vmatpush1.bf16.msra.mxu0 0
      %455 = vmatprep.subr.bf16.mxu0 0
      %456 = vmatpush1.bf16.msra.mxu0 0
      %457 = vmatprep.subr.bf16.mxu0 0
      %458 = vmatpush1.bf16.msra.mxu0 0
      %459 = vmatprep.subr.bf16.mxu0 0
      %460 = vmatpush1.bf16.msra.mxu0 0
      %461 = vmatprep.subr.bf16.mxu0 0
      %462 = vmatpush1.bf16.msra.mxu0 0
      %463 = vmatprep.subr.bf16.mxu0 0
      %464 = vmatpush1.bf16.msra.mxu0 0
      %465 = vmatprep.subr.bf16.mxu0 0
      %466 = vmatpush1.bf16.msra.mxu0 0
      %467 = vmatprep.subr.bf16.mxu0 0
      %468 = vmatpush1.bf16.msra.mxu0 0
      %469 = vmatprep.subr.bf16.mxu0 0
      %470 = vmatpush1.bf16.msra.mxu0 0
      %471 = vmatprep.subr.bf16.mxu0 0
      %472 = vmatpush1.bf16.msra.mxu0 0
      %473 = vmatprep.subr.bf16.mxu0 0
      %474 = vmatpush1.bf16.msra.mxu0 0
      %475 = vmatprep.mubr.bf16.mxu0 0
      %476 = vmatmul.mubr.bf16.gmra.mrb[0].mxu0 %v396
      %v477 = vpop.f32.mrb[0].mxu0
      %v478 = vadd.f32 0.0, %v477
      %v479 = vpop.f32.mrb[0].mxu0
      %v480 = vpop.f32.mrb[0].mxu0
      %v481 = vadd.f32 0.0, %v480
      %v482 = vpop.f32.mrb[0].mxu0
      %483 = vmatprep.mubr.bf16.mxu0 0
      %484 = vmatmul.mubr.bf16.gmra.mrb[0].mxu0 %v399
      %v485 = vpop.f32.mrb[0].mxu0
      %v486 = vadd.f32 0.0, %v485
      %v487 = vpop.f32.mrb[0].mxu0
      %v488 = vpop.f32.mrb[0].mxu0
      %v489 = vadd.f32 0.0, %v488
      %v490 = vpop.f32.mrb[0].mxu0
      %491 = vmatprep.mubr.bf16.mxu0 0
      %492 = vmatmul.mubr.bf16.gmra.mrb[0].mxu0 %v402
      %v493 = vpop.f32.mrb[0].mxu0
      %v494 = vadd.f32 0.0, %v493
      %v495 = vpop.f32.mrb[0].mxu0
      %v496 = vpop.f32.mrb[0].mxu0
      %v497 = vadd.f32 0.0, %v496
      %v498 = vpop.f32.mrb[0].mxu0
      %499 = vmatprep.mubr.bf16.mxu0 0
      %500 = vmatmul.mubr.bf16.gmra.mrb[0].mxu0 %v405
      %v501 = vpop.f32.mrb[0].mxu0
      %v502 = vadd.f32 0.0, %v501
      %v503 = vpop.f32.mrb[0].mxu0
      %v504 = vpop.f32.mrb[0].mxu0
      %v505 = vadd.f32 0.0, %v504
      %v506 = vpop.f32.mrb[0].mxu0
      %507 = vmatprep.mubr.bf16.mxu0 0
      %508 = vmatmul.mubr.bf16.gmra.mrb[0].mxu0 %v408
      %v509 = vpop.f32.mrb[0].mxu0
      %v510 = vadd.f32 0.0, %v509
      %v511 = vpop.f32.mrb[0].mxu0
      %v512 = vpop.f32.mrb[0].mxu0
      %v513 = vadd.f32 0.0, %v512
      %v514 = vpop.f32.mrb[0].mxu0
      %515 = vmatprep.mubr.bf16.mxu0 0
      %516 = vmatmul.mubr.bf16.gmra.mrb[0].mxu0 %v411
      %v517 = vpop.f32.mrb[0].mxu0
      %v518 = vadd.f32 0.0, %v517
      %v519 = vpop.f32.mrb[0].mxu0
      %v520 = vpop.f32.mrb[0].mxu0
      %v521 = vadd.f32 0.0, %v520
      %v522 = vpop.f32.mrb[0].mxu0
      %523 = vmatprep.mubr.bf16.mxu0 0
      %524 = vmatmul.mubr.bf16.gmra.mrb[0].mxu0 %v414
      %v525 = vpop.f32.mrb[0].mxu0
      %v526 = vadd.f32 0.0, %v525
      %v527 = vpop.f32.mrb[0].mxu0
      %v528 = vpop.f32.mrb[0].mxu0
      %v529 = vadd.f32 0.0, %v528
      %v530 = vpop.f32.mrb[0].mxu0
      %531 = vmatprep.mubr.bf16.mxu0 0
      %532 = vmatmul.mubr.bf16.gmra.mrb[0].mxu0 %v417
      %v533 = vpop.f32.mrb[0].mxu0
      %v534 = vadd.f32 0.0, %v533
      %v535 = vpop.f32.mrb[0].mxu0
      %v536 = vpop.f32.mrb[0].mxu0
      %v537 = vadd.f32 0.0, %v536
      %v538 = vpop.f32.mrb[0].mxu0
      %539 = vmatprep.mubr.bf16.mxu0 0
      %540 = vmatmul.mubr.bf16.gmra.mrb[0].mxu0 %v420
      %v541 = vpop.f32.mrb[0].mxu0
      %v542 = vadd.f32 0.0, %v541
      %v543 = vpop.f32.mrb[0].mxu0
      %v544 = vpop.f32.mrb[0].mxu0
      %v545 = vadd.f32 0.0, %v544
      %v546 = vpop.f32.mrb[0].mxu0
      %547 = vmatprep.mubr.bf16.mxu0 0
      %548 = vmatmul.mubr.bf16.gmra.mrb[0].mxu0 %v423
      %v549 = vpop.f32.mrb[0].mxu0
      %v550 = vadd.f32 0.0, %v549
      %v551 = vpop.f32.mrb[0].mxu0
      %v552 = vpop.f32.mrb[0].mxu0
      %v553 = vadd.f32 0.0, %v552
      %v554 = vpop.f32.mrb[0].mxu0
      %555 = vmatprep.mubr.bf16.mxu0 0
      %556 = vmatmul.mubr.bf16.gmra.mrb[0].mxu0 %v426
      %v557 = vpop.f32.mrb[0].mxu0
      %v558 = vadd.f32 0.0, %v557
      %v559 = vpop.f32.mrb[0].mxu0
      %v560 = vpop.f32.mrb[0].mxu0
      %v561 = vadd.f32 0.0, %v560
      %v562 = vpop.f32.mrb[0].mxu0
      %563 = vmatprep.mubr.bf16.mxu0 0
      %564 = vmatmul.mubr.bf16.gmra.mrb[0].mxu0 %v429
      %v565 = vpop.f32.mrb[0].mxu0
      %v566 = vadd.f32 0.0, %v565
      %v567 = vpop.f32.mrb[0].mxu0
      %v568 = vpop.f32.mrb[0].mxu0
      %v569 = vadd.f32 0.0, %v568
      %v570 = vpop.f32.mrb[0].mxu0
      %571 = vmatprep.mubr.bf16.mxu0 0
      %572 = vmatmul.mubr.bf16.gmra.mrb[0].mxu0 %v432
      %v573 = vpop.f32.mrb[0].mxu0
      %v574 = vadd.f32 0.0, %v573
      %v575 = vpop.f32.mrb[0].mxu0
      %v576 = vpop.f32.mrb[0].mxu0
      %v577 = vadd.f32 0.0, %v576
      %v578 = vpop.f32.mrb[0].mxu0
      %579 = vmatprep.mubr.bf16.mxu0 0
      %580 = vmatmul.mubr.bf16.gmra.mrb[0].mxu0 %v435
      %v581 = vpop.f32.mrb[0].mxu0
      %v582 = vadd.f32 0.0, %v581
      %v583 = vpop.f32.mrb[0].mxu0
      %v584 = vpop.f32.mrb[0].mxu0
      %v585 = vadd.f32 0.0, %v584
      %v586 = vpop.f32.mrb[0].mxu0
      %587 = vdwg.mxu0
      %v588 = vmax.f32 %v478, %v505
      %v589 = vmax.f32 %v481, %v510
      %v590 = vmax.f32 %v486, %v513
      %v591 = vmax.f32 %v489, %v518
      %v592 = vmax.f32 %v494, %v521
      %v593 = vmax.f32 %v497, %v526
      %v594 = vmax.f32 %v502, %v529
      %v595 = vmax.f32 %v534, %v561
      %v596 = vmax.f32 %v537, %v566
      %v597 = vmax.f32 %v542, %v569
      %v598 = vmax.f32 %v545, %v574
      %v599 = vmax.f32 %v550, %v577
      %v600 = vmax.f32 %v553, %v582
      %v601 = vmax.f32 %v558, %v585
      %v602 = vmax.f32 %v588, %v595
      %v603 = vmax.f32 %v589, %v596
      %v604 = vmax.f32 %v590, %v597
      %v605 = vmax.f32 %v591, %v598
      %v606 = vmax.f32 %v592, %v599
      %v607 = vmax.f32 %v593, %v600
      %v608 = vmax.f32 %v594, %v601
      %v609 = vld [vmem:[%s2] sm:$0x1]
      %v611 = vlaneseq
      %v612 = vshrl.u32 %v611, 7
      %v613 = vsub.s32 0, %v612
      %v614 = vrot.slane %v609, %v613
      %v616 = vadd.f32 %v602, %v614
      %v617 = vadd.f32 %v603, %v614
      %v618 = vadd.f32 %v604, %v614
      %v619 = vadd.f32 %v605, %v614
      %v620 = vadd.f32 %v606, %v614
      %v621 = vadd.f32 %v607, %v614
      %v622 = vadd.f32 %v608, %v614
      %vm623 = vcmp.ge.f32.partialorder %v616, 0.0
      %vm624 = vcmp.ge.f32.partialorder %v617, 0.0
      %vm625 = vcmp.ge.f32.partialorder %v618, 0.0
      %vm626 = vcmp.ge.f32.partialorder %v619, 0.0
      %vm627 = vcmp.ge.f32.partialorder %v620, 0.0
      %vm628 = vcmp.ge.f32.partialorder %v621, 0.0
      %vm629 = vcmp.ge.f32.partialorder %v622, 0.0
      %v630 = vmul.f32 %v616, 0.1
      %v631 = vmul.f32 %v617, 0.1
      %v632 = vmul.f32 %v618, 0.1
      %v633 = vmul.f32 %v619, 0.1
      %v634 = vmul.f32 %v620, 0.1
      %v635 = vmul.f32 %v621, 0.1
      %v636 = vmul.f32 %v622, 0.1
      %v637 = vsel %vm623, %v616, %v630
      %v638 = vsel %vm624, %v617, %v631
      %v639 = vsel %vm625, %v618, %v632
      %v640 = vsel %vm626, %v619, %v633
      %v641 = vsel %vm627, %v620, %v634
      %v642 = vsel %vm628, %v621, %v635
      %v643 = vsel %vm629, %v622, %v636
      %v644 = vpack.c.bf16 %v638, %v637
      %v645 = vpack.c.bf16 %v640, %v639
      %v646 = vpack.c.bf16 %v642, %v641
      %v647 = vpack.c.bf16 %v643, %v643
      %v648 = vld [vmem:[%s4] sm:$0xf]
      %v649 = vld [vmem:[%s4 + $0x4] sm:$0xf]
      %v650 = vld [vmem:[%s4 + $0x8] sm:$0xf]
      %v651 = vld [vmem:[%s4 + $0xc] sm:$0xf]
      %v652 = vld [vmem:[%s4 + $0x10] sm:$0xf]
      %v653 = vld [vmem:[%s4 + $0x14] sm:$0xf]
      %v654 = vld [vmem:[%s4 + $0x18] sm:$0xf]
      %v662 = vunpack.c.l.b16 %v648
      %v663 = vunpack.c.l.b16 %v649
      %v664 = vunpack.c.l.b16 %v650
      %v665 = vunpack.c.l.b16 %v651
      %v666 = vunpack.c.l.b16 %v652
      %v667 = vunpack.c.l.b16 %v653
      %v668 = vunpack.c.l.b16 %v654
      %v669 = vpack.c.b16 %v663, %v662
      %v670 = vpack.c.b16 %v665, %v664
      %v671 = vpack.c.b16 %v667, %v666
      %v672 = vpack.c.b16 %v668, %v668
      %vm673 = vcmask 457728
      %v675 = vsel %vm673, %v669, 0
      %v678 = vsel %vm673, %v670, 0
      %v681 = vsel %vm673, %v671, 0
      %v684 = vsel %vm673, %v672, 0
      %vm686 = vcmask 1043456
      %v688 = vsel %vm686, %v647, 0
      %690 = vmatprep.subr.bf16.mxu0 0
      %691 = vmatpush1.bf16.msra.mxu0 %v644
      %692 = vmatprep.subr.bf16.mxu0 0
      %693 = vmatpush1.bf16.msra.mxu0 %v645
      %694 = vmatprep.subr.bf16.mxu0 0
      %695 = vmatpush1.bf16.msra.mxu0 %v646
      %696 = vmatprep.subr.bf16.mxu0 0
      %697 = vmatpush1.bf16.msra.mxu0 %v688
      %698 = vmatprep.subr.bf16.mxu0 0
      %699 = vmatpush1.bf16.msra.mxu0 0
      %700 = vmatprep.subr.bf16.mxu0 0
      %701 = vmatpush1.bf16.msra.mxu0 0
      %702 = vmatprep.subr.bf16.mxu0 0
      %703 = vmatpush1.bf16.msra.mxu0 0
      %704 = vmatprep.subr.bf16.mxu0 0
      %705 = vmatpush1.bf16.msra.mxu0 0
      %706 = vmatprep.subr.bf16.mxu0 0
      %707 = vmatpush1.bf16.msra.mxu0 0
      %708 = vmatprep.subr.bf16.mxu0 0
      %709 = vmatpush1.bf16.msra.mxu0 0
      %710 = vmatprep.subr.bf16.mxu0 0
      %711 = vmatpush1.bf16.msra.mxu0 0
      %712 = vmatprep.subr.bf16.mxu0 0
      %713 = vmatpush1.bf16.msra.mxu0 0
      %714 = vmatprep.subr.bf16.mxu0 0
      %715 = vmatpush1.bf16.msra.mxu0 0
      %716 = vmatprep.subr.bf16.mxu0 0
      %717 = vmatpush1.bf16.msra.mxu0 0
      %718 = vmatprep.subr.bf16.mxu0 0
      %719 = vmatpush1.bf16.msra.mxu0 0
      %720 = vmatprep.subr.bf16.mxu0 0
      %721 = vmatpush1.bf16.msra.mxu0 0
      %722 = vmatprep.mubr.bf16.mxu0 0
      %723 = vmatmul.mubr.bf16.gmra.mrb[0].mxu0 %v675
      %v724 = vpop.f32.mrb[0].mxu0
      %v725 = vadd.f32 0.0, %v724
      %v726 = vpop.f32.mrb[0].mxu0
      %v727 = vpop.f32.mrb[0].mxu0
      %v728 = vadd.f32 0.0, %v727
      %v729 = vpop.f32.mrb[0].mxu0
      %730 = vmatprep.mubr.bf16.mxu0 0
      %731 = vmatmul.mubr.bf16.gmra.mrb[0].mxu0 %v678
      %v732 = vpop.f32.mrb[0].mxu0
      %v733 = vadd.f32 0.0, %v732
      %v734 = vpop.f32.mrb[0].mxu0
      %v735 = vpop.f32.mrb[0].mxu0
      %v736 = vadd.f32 0.0, %v735
      %v737 = vpop.f32.mrb[0].mxu0
      %738 = vmatprep.mubr.bf16.mxu0 0
      %739 = vmatmul.mubr.bf16.gmra.mrb[0].mxu0 %v681
      %v740 = vpop.f32.mrb[0].mxu0
      %v741 = vadd.f32 0.0, %v740
      %v742 = vpop.f32.mrb[0].mxu0
      %v743 = vpop.f32.mrb[0].mxu0
      %v744 = vadd.f32 0.0, %v743
      %v745 = vpop.f32.mrb[0].mxu0
      %746 = vmatprep.mubr.bf16.mxu0 0
      %747 = vmatmul.mubr.bf16.gmra.mrb[0].mxu0 %v684
      %v748 = vpop.f32.mrb[0].mxu0
      %v749 = vadd.f32 0.0, %v748
      %v750 = vpop.f32.mrb[0].mxu0
      %v751 = vpop.f32.mrb[0].mxu0
      %v752 = vpop.f32.mrb[0].mxu0
      %753 = vdwg.mxu0
      %v754 = vpack.c.bf16 %v728, %v725
      %v755 = vpack.c.bf16 %v736, %v733
      %v756 = vpack.c.bf16 %v744, %v741
      %v757 = vpack.c.bf16 %v749, %v749
      %v758 = vld [vmem:[%s3] sm:$0xf]
      %v759 = vld [vmem:[%s3 + $0x4] sm:$0xf]
      %v760 = vld [vmem:[%s3 + $0x8] sm:$0xf]
      %v761 = vld [vmem:[%s3 + $0xc] sm:$0xf]
      %v762 = vld [vmem:[%s3 + $0x10] sm:$0xf]
      %v763 = vld [vmem:[%s3 + $0x14] sm:$0xf]
      %s764 = scalar_lea.vmem %s4, 28
      %v765 = vld [vmem:[%s764] sm:$0xf]
      %v766 = vld [vmem:[%s764 + $0x4] sm:$0xf]
      %v767 = vld [vmem:[%s764 + $0x8] sm:$0xf]
      %v768 = vld [vmem:[%s764 + $0xc] sm:$0xf]
      %v769 = vld [vmem:[%s764 + $0x10] sm:$0xf]
      %v770 = vld [vmem:[%s764 + $0x14] sm:$0xf]
      %v771 = vld [vmem:[%s764 + $0x18] sm:$0xf]
      %v779 = vunpack.c.l.b16 %v765
      %v780 = vunpack.c.l.b16 %v766
      %v781 = vunpack.c.l.b16 %v767
      %v782 = vunpack.c.l.b16 %v768
      %v783 = vunpack.c.l.b16 %v769
      %v784 = vunpack.c.l.b16 %v770
      %v785 = vunpack.c.l.b16 %v771
      %v786 = vpack.c.b16 %v780, %v779
      %v787 = vpack.c.b16 %v782, %v781
      %v788 = vpack.c.b16 %v784, %v783
      %v789 = vpack.c.b16 %v785, %v785
      %v791 = vsel %vm673, %v786, 0
      %v794 = vsel %vm673, %v787, 0
      %v797 = vsel %vm673, %v788, 0
      %v800 = vsel %vm673, %v789, 0
      %802 = vmatprep.subr.bf16.mxu0 0
      %803 = vmatpush1.bf16.msra.mxu0 %v644
      %804 = vmatprep.subr.bf16.mxu0 0
      %805 = vmatpush1.bf16.msra.mxu0 %v645
      %806 = vmatprep.subr.bf16.mxu0 0
      %807 = vmatpush1.bf16.msra.mxu0 %v646
      %808 = vmatprep.subr.bf16.mxu0 0
      %809 = vmatpush1.bf16.msra.mxu0 %v688
      %810 = vmatprep.subr.bf16.mxu0 0
      %811 = vmatpush1.bf16.msra.mxu0 0
      %812 = vmatprep.subr.bf16.mxu0 0
      %813 = vmatpush1.bf16.msra.mxu0 0
      %814 = vmatprep.subr.bf16.mxu0 0
      %815 = vmatpush1.bf16.msra.mxu0 0
      %816 = vmatprep.subr.bf16.mxu0 0
      %817 = vmatpush1.bf16.msra.mxu0 0
      %818 = vmatprep.subr.bf16.mxu0 0
      %819 = vmatpush1.bf16.msra.mxu0 0
      %820 = vmatprep.subr.bf16.mxu0 0
      %821 = vmatpush1.bf16.msra.mxu0 0
      %822 = vmatprep.subr.bf16.mxu0 0
      %823 = vmatpush1.bf16.msra.mxu0 0
      %824 = vmatprep.subr.bf16.mxu0 0
      %825 = vmatpush1.bf16.msra.mxu0 0
      %826 = vmatprep.subr.bf16.mxu0 0
      %827 = vmatpush1.bf16.msra.mxu0 0
      %828 = vmatprep.subr.bf16.mxu0 0
      %829 = vmatpush1.bf16.msra.mxu0 0
      %830 = vmatprep.subr.bf16.mxu0 0
      %831 = vmatpush1.bf16.msra.mxu0 0
      %832 = vmatprep.subr.bf16.mxu0 0
      %833 = vmatpush1.bf16.msra.mxu0 0
      %834 = vmatprep.mubr.bf16.mxu0 0
      %835 = vmatmul.mubr.bf16.gmra.mrb[0].mxu0 %v791
      %v836 = vpop.f32.mrb[0].mxu0
      %v837 = vadd.f32 0.0, %v836
      %v838 = vpop.f32.mrb[0].mxu0
      %v839 = vpop.f32.mrb[0].mxu0
      %v840 = vadd.f32 0.0, %v839
      %v841 = vpop.f32.mrb[0].mxu0
      %842 = vmatprep.mubr.bf16.mxu0 0
      %843 = vmatmul.mubr.bf16.gmra.mrb[0].mxu0 %v794
      %v844 = vpop.f32.mrb[0].mxu0
      %v845 = vadd.f32 0.0, %v844
      %v846 = vpop.f32.mrb[0].mxu0
      %v847 = vpop.f32.mrb[0].mxu0
      %v848 = vadd.f32 0.0, %v847
      %v849 = vpop.f32.mrb[0].mxu0
      %850 = vmatprep.mubr.bf16.mxu0 0
      %851 = vmatmul.mubr.bf16.gmra.mrb[0].mxu0 %v797
      %v852 = vpop.f32.mrb[0].mxu0
      %v853 = vadd.f32 0.0, %v852
      %v854 = vpop.f32.mrb[0].mxu0
      %v855 = vpop.f32.mrb[0].mxu0
      %v856 = vadd.f32 0.0, %v855
      %v857 = vpop.f32.mrb[0].mxu0
      %858 = vmatprep.mubr.bf16.mxu0 0
      %859 = vmatmul.mubr.bf16.gmra.mrb[0].mxu0 %v800
      %v860 = vpop.f32.mrb[0].mxu0
      %v861 = vadd.f32 0.0, %v860
      %v862 = vpop.f32.mrb[0].mxu0
      %v863 = vpop.f32.mrb[0].mxu0
      %v864 = vpop.f32.mrb[0].mxu0
      %865 = vdwg.mxu0
      %v866 = vpack.c.bf16 %v840, %v837
      %v867 = vpack.c.bf16 %v848, %v845
      %v868 = vpack.c.bf16 %v856, %v853
      %v869 = vpack.c.bf16 %v861, %v861
      %s870 = scalar_lea.vmem %s3, 24
      %v871 = vld [vmem:[%s870] sm:$0xf]
      %v872 = vld [vmem:[%s870 + $0x4] sm:$0xf]
      %v873 = vld [vmem:[%s870 + $0x8] sm:$0xf]
      %v874 = vld [vmem:[%s870 + $0xc] sm:$0xf]
      %v875 = vld [vmem:[%s870 + $0x10] sm:$0xf]
      %v876 = vld [vmem:[%s870 + $0x14] sm:$0xf]
      %v883 = vunpack.c.l.b16 %v871
      %v884 = vunpack.c.l.b16 %v872
      %v885 = vunpack.c.l.b16 %v873
      %v886 = vunpack.c.l.b16 %v874
      %v887 = vunpack.c.l.b16 %v875
      %v888 = vunpack.c.l.b16 %v876
      %v889 = vpack.c.b16 %v884, %v883
      %v890 = vpack.c.b16 %v886, %v885
      %v891 = vpack.c.b16 %v888, %v887
      %vm895 = vcmask 392192
      %v897 = vsel %vm895, %v866, 0
      %v900 = vsel %vm895, %v867, 0
      %v903 = vsel %vm895, %v868, 0
      %v906 = vsel %vm895, %v869, 0
      %908 = vmatprep.subr.bf16.mxu0 0
      %909 = vmatpush1.bf16.msra.mxu0 %v889
      %910 = vmatprep.subr.bf16.mxu0 0
      %911 = vmatpush1.bf16.msra.mxu0 %v890
      %912 = vmatprep.subr.bf16.mxu0 0
      %913 = vmatpush1.bf16.msra.mxu0 %v891
      %914 = vmatprep.subr.bf16.mxu0 0
      %915 = vmatpush1.bf16.msra.mxu0 0
      %916 = vmatprep.subr.bf16.mxu0 0
      %917 = vmatpush1.bf16.msra.mxu0 0
      %918 = vmatprep.subr.bf16.mxu0 0
      %919 = vmatpush1.bf16.msra.mxu0 0
      %920 = vmatprep.subr.bf16.mxu0 0
      %921 = vmatpush1.bf16.msra.mxu0 0
      %922 = vmatprep.subr.bf16.mxu0 0
      %923 = vmatpush1.bf16.msra.mxu0 0
      %924 = vmatprep.subr.bf16.mxu0 0
      %925 = vmatpush1.bf16.msra.mxu0 0
      %926 = vmatprep.subr.bf16.mxu0 0
      %927 = vmatpush1.bf16.msra.mxu0 0
      %928 = vmatprep.subr.bf16.mxu0 0
      %929 = vmatpush1.bf16.msra.mxu0 0
      %930 = vmatprep.subr.bf16.mxu0 0
      %931 = vmatpush1.bf16.msra.mxu0 0
      %932 = vmatprep.subr.bf16.mxu0 0
      %933 = vmatpush1.bf16.msra.mxu0 0
      %934 = vmatprep.subr.bf16.mxu0 0
      %935 = vmatpush1.bf16.msra.mxu0 0
      %936 = vmatprep.subr.bf16.mxu0 0
      %937 = vmatpush1.bf16.msra.mxu0 0
      %938 = vmatprep.subr.bf16.mxu0 0
      %939 = vmatpush1.bf16.msra.mxu0 0
      %940 = vmatprep.mubr.bf16.mxu0 0
      %941 = vmatmul.mubr.bf16.gmra.mrb[0].mxu0 %v897
      %v942 = vpop.f32.mrb[0].mxu0
      %v943 = vadd.f32 0.0, %v942
      %v944 = vpop.f32.mrb[0].mxu0
      %v945 = vpop.f32.mrb[0].mxu0
      %v946 = vadd.f32 0.0, %v945
      %v947 = vpop.f32.mrb[0].mxu0
      %948 = vmatprep.mubr.bf16.mxu0 0
      %949 = vmatmul.mubr.bf16.gmra.mrb[0].mxu0 %v900
      %v950 = vpop.f32.mrb[0].mxu0
      %v951 = vadd.f32 0.0, %v950
      %v952 = vpop.f32.mrb[0].mxu0
      %v953 = vpop.f32.mrb[0].mxu0
      %v954 = vadd.f32 0.0, %v953
      %v955 = vpop.f32.mrb[0].mxu0
      %956 = vmatprep.mubr.bf16.mxu0 0
      %957 = vmatmul.mubr.bf16.gmra.mrb[0].mxu0 %v903
      %v958 = vpop.f32.mrb[0].mxu0
      %v959 = vadd.f32 0.0, %v958
      %v960 = vpop.f32.mrb[0].mxu0
      %v961 = vpop.f32.mrb[0].mxu0
      %v962 = vadd.f32 0.0, %v961
      %v963 = vpop.f32.mrb[0].mxu0
      %964 = vmatprep.mubr.bf16.mxu0 0
      %965 = vmatmul.mubr.bf16.gmra.mrb[0].mxu0 %v906
      %v966 = vpop.f32.mrb[0].mxu0
      %v967 = vadd.f32 0.0, %v966
      %v968 = vpop.f32.mrb[0].mxu0
      %v969 = vpop.f32.mrb[0].mxu0
      %v970 = vpop.f32.mrb[0].mxu0
      %971 = vdwg.mxu0
      %v978 = vunpack.c.l.b16 %v758
      %v979 = vunpack.c.l.b16 %v759
      %v980 = vunpack.c.l.b16 %v760
      %v981 = vunpack.c.l.b16 %v761
      %v982 = vunpack.c.l.b16 %v762
      %v983 = vunpack.c.l.b16 %v763
      %v984 = vpack.c.b16 %v979, %v978
      %v985 = vpack.c.b16 %v981, %v980
      %v986 = vpack.c.b16 %v983, %v982
      %v991 = vsel %vm895, %v754, 0
      %v994 = vsel %vm895, %v755, 0
      %v997 = vsel %vm895, %v756, 0
      %v1000 = vsel %vm895, %v757, 0
      %1002 = vmatprep.subr.bf16.mxu0 0
      %1003 = vmatpush1.bf16.msra.mxu0 %v984
      %1004 = vmatprep.subr.bf16.mxu0 0
      %1005 = vmatpush1.bf16.msra.mxu0 %v985
      %1006 = vmatprep.subr.bf16.mxu0 0
      %1007 = vmatpush1.bf16.msra.mxu0 %v986
      %1008 = vmatprep.subr.bf16.mxu0 0
      %1009 = vmatpush1.bf16.msra.mxu0 0
      %1010 = vmatprep.subr.bf16.mxu0 0
      %1011 = vmatpush1.bf16.msra.mxu0 0
      %1012 = vmatprep.subr.bf16.mxu0 0
      %1013 = vmatpush1.bf16.msra.mxu0 0
      %1014 = vmatprep.subr.bf16.mxu0 0
      %1015 = vmatpush1.bf16.msra.mxu0 0
      %1016 = vmatprep.subr.bf16.mxu0 0
      %1017 = vmatpush1.bf16.msra.mxu0 0
      %1018 = vmatprep.subr.bf16.mxu0 0
      %1019 = vmatpush1.bf16.msra.mxu0 0
      %1020 = vmatprep.subr.bf16.mxu0 0
      %1021 = vmatpush1.bf16.msra.mxu0 0
      %1022 = vmatprep.subr.bf16.mxu0 0
      %1023 = vmatpush1.bf16.msra.mxu0 0
      %1024 = vmatprep.subr.bf16.mxu0 0
      %1025 = vmatpush1.bf16.msra.mxu0 0
      %1026 = vmatprep.subr.bf16.mxu0 0
      %1027 = vmatpush1.bf16.msra.mxu0 0
      %1028 = vmatprep.subr.bf16.mxu0 0
      %1029 = vmatpush1.bf16.msra.mxu0 0
      %1030 = vmatprep.subr.bf16.mxu0 0
      %1031 = vmatpush1.bf16.msra.mxu0 0
      %1032 = vmatprep.subr.bf16.mxu0 0
      %1033 = vmatpush1.bf16.msra.mxu0 0
      %1034 = vmatprep.mubr.bf16.mxu0 0
      %1035 = vmatmul.mubr.bf16.gmra.mrb[0].mxu0 %v991
      %v1036 = vpop.f32.mrb[0].mxu0
      %v1037 = vadd.f32 %v943, %v1036
      %v1038 = vpop.f32.mrb[0].mxu0
      %v1039 = vpop.f32.mrb[0].mxu0
      %v1040 = vadd.f32 %v946, %v1039
      %v1041 = vpop.f32.mrb[0].mxu0
      %1042 = vmatprep.mubr.bf16.mxu0 0
      %1043 = vmatmul.mubr.bf16.gmra.mrb[0].mxu0 %v994
      %v1044 = vpop.f32.mrb[0].mxu0
      %v1045 = vadd.f32 %v951, %v1044
      %v1046 = vpop.f32.mrb[0].mxu0
      %v1047 = vpop.f32.mrb[0].mxu0
      %v1048 = vadd.f32 %v954, %v1047
      %v1049 = vpop.f32.mrb[0].mxu0
      %1050 = vmatprep.mubr.bf16.mxu0 0
      %1051 = vmatmul.mubr.bf16.gmra.mrb[0].mxu0 %v997
      %v1052 = vpop.f32.mrb[0].mxu0
      %v1053 = vadd.f32 %v959, %v1052
      %v1054 = vpop.f32.mrb[0].mxu0
      %v1055 = vpop.f32.mrb[0].mxu0
      %v1056 = vadd.f32 %v962, %v1055
      %v1057 = vpop.f32.mrb[0].mxu0
      %1058 = vmatprep.mubr.bf16.mxu0 0
      %1059 = vmatmul.mubr.bf16.gmra.mrb[0].mxu0 %v1000
      %v1060 = vpop.f32.mrb[0].mxu0
      %v1061 = vadd.f32 %v967, %v1060
      %v1062 = vpop.f32.mrb[0].mxu0
      %v1063 = vpop.f32.mrb[0].mxu0
      %v1064 = vpop.f32.mrb[0].mxu0
      %1065 = vdwg.mxu0
      %s1066 = scalar_lea.vmem %s4, 56
      %v1067 = vld [vmem:[%s1066] sm:$0xf]
      %v1068 = vld [vmem:[%s1066 + $0x4] sm:$0xf]
      %v1069 = vld [vmem:[%s1066 + $0x8] sm:$0xf]
      %v1070 = vld [vmem:[%s1066 + $0xc] sm:$0xf]
      %v1071 = vld [vmem:[%s1066 + $0x10] sm:$0xf]
      %v1072 = vld [vmem:[%s1066 + $0x14] sm:$0xf]
      %v1073 = vld [vmem:[%s1066 + $0x18] sm:$0xf]
      %v1081 = vunpack.c.l.b16 %v1067
      %v1082 = vunpack.c.l.b16 %v1068
      %v1083 = vunpack.c.l.b16 %v1069
      %v1084 = vunpack.c.l.b16 %v1070
      %v1085 = vunpack.c.l.b16 %v1071
      %v1086 = vunpack.c.l.b16 %v1072
      %v1087 = vunpack.c.l.b16 %v1073
      %v1088 = vpack.c.b16 %v1082, %v1081
      %v1089 = vpack.c.b16 %v1084, %v1083
      %v1090 = vpack.c.b16 %v1086, %v1085
      %v1091 = vpack.c.b16 %v1087, %v1087
      %v1093 = vsel %vm673, %v1088, 0
      %v1096 = vsel %vm673, %v1089, 0
      %v1099 = vsel %vm673, %v1090, 0
      %v1102 = vsel %vm673, %v1091, 0
      %1104 = vmatprep.subr.bf16.mxu0 0
      %1105 = vmatpush1.bf16.msra.mxu0 %v644
      %1106 = vmatprep.subr.bf16.mxu0 0
      %1107 = vmatpush1.bf16.msra.mxu0 %v645
      %1108 = vmatprep.subr.bf16.mxu0 0
      %1109 = vmatpush1.bf16.msra.mxu0 %v646
      %1110 = vmatprep.subr.bf16.mxu0 0
      %1111 = vmatpush1.bf16.msra.mxu0 %v688
      %1112 = vmatprep.subr.bf16.mxu0 0
      %1113 = vmatpush1.bf16.msra.mxu0 0
      %1114 = vmatprep.subr.bf16.mxu0 0
      %1115 = vmatpush1.bf16.msra.mxu0 0
      %1116 = vmatprep.subr.bf16.mxu0 0
      %1117 = vmatpush1.bf16.msra.mxu0 0
      %1118 = vmatprep.subr.bf16.mxu0 0
      %1119 = vmatpush1.bf16.msra.mxu0 0
      %1120 = vmatprep.subr.bf16.mxu0 0
      %1121 = vmatpush1.bf16.msra.mxu0 0
      %1122 = vmatprep.subr.bf16.mxu0 0
      %1123 = vmatpush1.bf16.msra.mxu0 0
      %1124 = vmatprep.subr.bf16.mxu0 0
      %1125 = vmatpush1.bf16.msra.mxu0 0
      %1126 = vmatprep.subr.bf16.mxu0 0
      %1127 = vmatpush1.bf16.msra.mxu0 0
      %1128 = vmatprep.subr.bf16.mxu0 0
      %1129 = vmatpush1.bf16.msra.mxu0 0
      %1130 = vmatprep.subr.bf16.mxu0 0
      %1131 = vmatpush1.bf16.msra.mxu0 0
      %1132 = vmatprep.subr.bf16.mxu0 0
      %1133 = vmatpush1.bf16.msra.mxu0 0
      %1134 = vmatprep.subr.bf16.mxu0 0
      %1135 = vmatpush1.bf16.msra.mxu0 0
      %1136 = vmatprep.mubr.bf16.mxu0 0
      %1137 = vmatmul.mubr.bf16.gmra.mrb[0].mxu0 %v1093
      %v1138 = vpop.f32.mrb[0].mxu0
      %v1139 = vadd.f32 0.0, %v1138
      %v1140 = vpop.f32.mrb[0].mxu0
      %v1141 = vpop.f32.mrb[0].mxu0
      %v1142 = vadd.f32 0.0, %v1141
      %v1143 = vpop.f32.mrb[0].mxu0
      %1144 = vmatprep.mubr.bf16.mxu0 0
      %1145 = vmatmul.mubr.bf16.gmra.mrb[0].mxu0 %v1096
      %v1146 = vpop.f32.mrb[0].mxu0
      %v1147 = vadd.f32 0.0, %v1146
      %v1148 = vpop.f32.mrb[0].mxu0
      %v1149 = vpop.f32.mrb[0].mxu0
      %v1150 = vadd.f32 0.0, %v1149
      %v1151 = vpop.f32.mrb[0].mxu0
      %1152 = vmatprep.mubr.bf16.mxu0 0
      %1153 = vmatmul.mubr.bf16.gmra.mrb[0].mxu0 %v1099
      %v1154 = vpop.f32.mrb[0].mxu0
      %v1155 = vadd.f32 0.0, %v1154
      %v1156 = vpop.f32.mrb[0].mxu0
      %v1157 = vpop.f32.mrb[0].mxu0
      %v1158 = vadd.f32 0.0, %v1157
      %v1159 = vpop.f32.mrb[0].mxu0
      %1160 = vmatprep.mubr.bf16.mxu0 0
      %1161 = vmatmul.mubr.bf16.gmra.mrb[0].mxu0 %v1102
      %v1162 = vpop.f32.mrb[0].mxu0
      %v1163 = vadd.f32 0.0, %v1162
      %v1164 = vpop.f32.mrb[0].mxu0
      %v1165 = vpop.f32.mrb[0].mxu0
      %v1166 = vpop.f32.mrb[0].mxu0
      %1167 = vdwg.mxu0
      %v1168 = vpack.c.bf16 %v1142, %v1139
      %v1169 = vpack.c.bf16 %v1150, %v1147
      %v1170 = vpack.c.bf16 %v1158, %v1155
      %v1171 = vpack.c.bf16 %v1163, %v1163
      %s1172 = scalar_lea.vmem %s3, 48
      %v1173 = vld [vmem:[%s1172] sm:$0xf]
      %v1174 = vld [vmem:[%s1172 + $0x4] sm:$0xf]
      %v1175 = vld [vmem:[%s1172 + $0x8] sm:$0xf]
      %v1176 = vld [vmem:[%s1172 + $0xc] sm:$0xf]
      %v1177 = vld [vmem:[%s1172 + $0x10] sm:$0xf]
      %v1178 = vld [vmem:[%s1172 + $0x14] sm:$0xf]
      %v1185 = vunpack.c.l.b16 %v1173
      %v1186 = vunpack.c.l.b16 %v1174
      %v1187 = vunpack.c.l.b16 %v1175
      %v1188 = vunpack.c.l.b16 %v1176
      %v1189 = vunpack.c.l.b16 %v1177
      %v1190 = vunpack.c.l.b16 %v1178
      %v1191 = vpack.c.b16 %v1186, %v1185
      %v1192 = vpack.c.b16 %v1188, %v1187
      %v1193 = vpack.c.b16 %v1190, %v1189
      %v1198 = vsel %vm895, %v1168, 0
      %v1201 = vsel %vm895, %v1169, 0
      %v1204 = vsel %vm895, %v1170, 0
      %v1207 = vsel %vm895, %v1171, 0
      %1209 = vmatprep.subr.bf16.mxu0 0
      %1210 = vmatpush1.bf16.msra.mxu0 %v1191
      %1211 = vmatprep.subr.bf16.mxu0 0
      %1212 = vmatpush1.bf16.msra.mxu0 %v1192
      %1213 = vmatprep.subr.bf16.mxu0 0
      %1214 = vmatpush1.bf16.msra.mxu0 %v1193
      %1215 = vmatprep.subr.bf16.mxu0 0
      %1216 = vmatpush1.bf16.msra.mxu0 0
      %1217 = vmatprep.subr.bf16.mxu0 0
      %1218 = vmatpush1.bf16.msra.mxu0 0
      %1219 = vmatprep.subr.bf16.mxu0 0
      %1220 = vmatpush1.bf16.msra.mxu0 0
      %1221 = vmatprep.subr.bf16.mxu0 0
      %1222 = vmatpush1.bf16.msra.mxu0 0
      %1223 = vmatprep.subr.bf16.mxu0 0
      %1224 = vmatpush1.bf16.msra.mxu0 0
      %1225 = vmatprep.subr.bf16.mxu0 0
      %1226 = vmatpush1.bf16.msra.mxu0 0
      %1227 = vmatprep.subr.bf16.mxu0 0
      %1228 = vmatpush1.bf16.msra.mxu0 0
      %1229 = vmatprep.subr.bf16.mxu0 0
      %1230 = vmatpush1.bf16.msra.mxu0 0
      %1231 = vmatprep.subr.bf16.mxu0 0
      %1232 = vmatpush1.bf16.msra.mxu0 0
      %1233 = vmatprep.subr.bf16.mxu0 0
      %1234 = vmatpush1.bf16.msra.mxu0 0
      %1235 = vmatprep.subr.bf16.mxu0 0
      %1236 = vmatpush1.bf16.msra.mxu0 0
      %1237 = vmatprep.subr.bf16.mxu0 0
      %1238 = vmatpush1.bf16.msra.mxu0 0
      %1239 = vmatprep.subr.bf16.mxu0 0
      %1240 = vmatpush1.bf16.msra.mxu0 0
      %1241 = vmatprep.mubr.bf16.mxu0 0
      %1242 = vmatmul.mubr.bf16.gmra.mrb[0].mxu0 %v1198
      %v1243 = vpop.f32.mrb[0].mxu0
      %v1244 = vadd.f32 0.0, %v1243
      %v1245 = vpop.f32.mrb[0].mxu0
      %v1246 = vpop.f32.mrb[0].mxu0
      %v1247 = vadd.f32 0.0, %v1246
      %v1248 = vpop.f32.mrb[0].mxu0
      %1249 = vmatprep.mubr.bf16.mxu0 0
      %1250 = vmatmul.mubr.bf16.gmra.mrb[0].mxu0 %v1201
      %v1251 = vpop.f32.mrb[0].mxu0
      %v1252 = vadd.f32 0.0, %v1251
      %v1253 = vpop.f32.mrb[0].mxu0
      %v1254 = vpop.f32.mrb[0].mxu0
      %v1255 = vadd.f32 0.0, %v1254
      %v1256 = vpop.f32.mrb[0].mxu0
      %1257 = vmatprep.mubr.bf16.mxu0 0
      %1258 = vmatmul.mubr.bf16.gmra.mrb[0].mxu0 %v1204
      %v1259 = vpop.f32.mrb[0].mxu0
      %v1260 = vadd.f32 0.0, %v1259
      %v1261 = vpop.f32.mrb[0].mxu0
      %v1262 = vpop.f32.mrb[0].mxu0
      %v1263 = vadd.f32 0.0, %v1262
      %v1264 = vpop.f32.mrb[0].mxu0
      %1265 = vmatprep.mubr.bf16.mxu0 0
      %1266 = vmatmul.mubr.bf16.gmra.mrb[0].mxu0 %v1207
      %v1267 = vpop.f32.mrb[0].mxu0
      %v1268 = vadd.f32 0.0, %v1267
      %v1269 = vpop.f32.mrb[0].mxu0
      %v1270 = vpop.f32.mrb[0].mxu0
      %v1271 = vpop.f32.mrb[0].mxu0
      %1272 = vdwg.mxu0
      %v1273 = vadd.f32 %v1037, %v1244
      %v1274 = vadd.f32 %v1040, %v1247
      %v1275 = vadd.f32 %v1045, %v1252
      %v1276 = vadd.f32 %v1048, %v1255
      %v1277 = vadd.f32 %v1053, %v1260
      %v1278 = vadd.f32 %v1056, %v1263
      %v1279 = vadd.f32 %v1061, %v1268
      %s1280 = scalar_lea.vmem %s4, 84
      %v1281 = vld [vmem:[%s1280] sm:$0xf]
      %v1282 = vld [vmem:[%s1280 + $0x4] sm:$0xf]
      %v1283 = vld [vmem:[%s1280 + $0x8] sm:$0xf]
      %v1284 = vld [vmem:[%s1280 + $0xc] sm:$0xf]
      %v1285 = vld [vmem:[%s1280 + $0x10] sm:$0xf]
      %v1286 = vld [vmem:[%s1280 + $0x14] sm:$0xf]
      %v1287 = vld [vmem:[%s1280 + $0x18] sm:$0xf]
      %v1295 = vunpack.c.l.b16 %v1281
      %v1296 = vunpack.c.l.b16 %v1282
      %v1297 = vunpack.c.l.b16 %v1283
      %v1298 = vunpack.c.l.b16 %v1284
      %v1299 = vunpack.c.l.b16 %v1285
      %v1300 = vunpack.c.l.b16 %v1286
      %v1301 = vunpack.c.l.b16 %v1287
      %v1302 = vpack.c.b16 %v1296, %v1295
      %v1303 = vpack.c.b16 %v1298, %v1297
      %v1304 = vpack.c.b16 %v1300, %v1299
      %v1305 = vpack.c.b16 %v1301, %v1301
      %v1307 = vsel %vm673, %v1302, 0
      %v1310 = vsel %vm673, %v1303, 0
      %v1313 = vsel %vm673, %v1304, 0
      %v1316 = vsel %vm673, %v1305, 0
      %1318 = vmatprep.subr.bf16.mxu0 0
      %1319 = vmatpush1.bf16.msra.mxu0 %v644
      %1320 = vmatprep.subr.bf16.mxu0 0
      %1321 = vmatpush1.bf16.msra.mxu0 %v645
      %1322 = vmatprep.subr.bf16.mxu0 0
      %1323 = vmatpush1.bf16.msra.mxu0 %v646
      %1324 = vmatprep.subr.bf16.mxu0 0
      %1325 = vmatpush1.bf16.msra.mxu0 %v688
      %1326 = vmatprep.subr.bf16.mxu0 0
      %1327 = vmatpush1.bf16.msra.mxu0 0
      %1328 = vmatprep.subr.bf16.mxu0 0
      %1329 = vmatpush1.bf16.msra.mxu0 0
      %1330 = vmatprep.subr.bf16.mxu0 0
      %1331 = vmatpush1.bf16.msra.mxu0 0
      %1332 = vmatprep.subr.bf16.mxu0 0
      %1333 = vmatpush1.bf16.msra.mxu0 0
      %1334 = vmatprep.subr.bf16.mxu0 0
      %1335 = vmatpush1.bf16.msra.mxu0 0
      %1336 = vmatprep.subr.bf16.mxu0 0
      %1337 = vmatpush1.bf16.msra.mxu0 0
      %1338 = vmatprep.subr.bf16.mxu0 0
      %1339 = vmatpush1.bf16.msra.mxu0 0
      %1340 = vmatprep.subr.bf16.mxu0 0
      %1341 = vmatpush1.bf16.msra.mxu0 0
      %1342 = vmatprep.subr.bf16.mxu0 0
      %1343 = vmatpush1.bf16.msra.mxu0 0
      %1344 = vmatprep.subr.bf16.mxu0 0
      %1345 = vmatpush1.bf16.msra.mxu0 0
      %1346 = vmatprep.subr.bf16.mxu0 0
      %1347 = vmatpush1.bf16.msra.mxu0 0
      %1348 = vmatprep.subr.bf16.mxu0 0
      %1349 = vmatpush1.bf16.msra.mxu0 0
      %1350 = vmatprep.mubr.bf16.mxu0 0
      %1351 = vmatmul.mubr.bf16.gmra.mrb[0].mxu0 %v1307
      %v1352 = vpop.f32.mrb[0].mxu0
      %v1353 = vadd.f32 0.0, %v1352
      %v1354 = vpop.f32.mrb[0].mxu0
      %v1355 = vpop.f32.mrb[0].mxu0
      %v1356 = vadd.f32 0.0, %v1355
      %v1357 = vpop.f32.mrb[0].mxu0
      %1358 = vmatprep.mubr.bf16.mxu0 0
      %1359 = vmatmul.mubr.bf16.gmra.mrb[0].mxu0 %v1310
      %v1360 = vpop.f32.mrb[0].mxu0
      %v1361 = vadd.f32 0.0, %v1360
      %v1362 = vpop.f32.mrb[0].mxu0
      %v1363 = vpop.f32.mrb[0].mxu0
      %v1364 = vadd.f32 0.0, %v1363
      %v1365 = vpop.f32.mrb[0].mxu0
      %1366 = vmatprep.mubr.bf16.mxu0 0
      %1367 = vmatmul.mubr.bf16.gmra.mrb[0].mxu0 %v1313
      %v1368 = vpop.f32.mrb[0].mxu0
      %v1369 = vadd.f32 0.0, %v1368
      %v1370 = vpop.f32.mrb[0].mxu0
      %v1371 = vpop.f32.mrb[0].mxu0
      %v1372 = vadd.f32 0.0, %v1371
      %v1373 = vpop.f32.mrb[0].mxu0
      %1374 = vmatprep.mubr.bf16.mxu0 0
      %1375 = vmatmul.mubr.bf16.gmra.mrb[0].mxu0 %v1316
      %v1376 = vpop.f32.mrb[0].mxu0
      %v1377 = vadd.f32 0.0, %v1376
      %v1378 = vpop.f32.mrb[0].mxu0
      %v1379 = vpop.f32.mrb[0].mxu0
      %v1380 = vpop.f32.mrb[0].mxu0
      %1381 = vdwg.mxu0
      %v1382 = vpack.c.bf16 %v1356, %v1353
      %v1383 = vpack.c.bf16 %v1364, %v1361
      %v1384 = vpack.c.bf16 %v1372, %v1369
      %v1385 = vpack.c.bf16 %v1377, %v1377
      %s1386 = scalar_lea.vmem %s3, 72
      %v1387 = vld [vmem:[%s1386] sm:$0xf]
      %v1388 = vld [vmem:[%s1386 + $0x4] sm:$0xf]
      %v1389 = vld [vmem:[%s1386 + $0x8] sm:$0xf]
      %v1390 = vld [vmem:[%s1386 + $0xc] sm:$0xf]
      %v1391 = vld [vmem:[%s1386 + $0x10] sm:$0xf]
      %v1392 = vld [vmem:[%s1386 + $0x14] sm:$0xf]
      %v1399 = vunpack.c.l.b16 %v1387
      %v1400 = vunpack.c.l.b16 %v1388
      %v1401 = vunpack.c.l.b16 %v1389
      %v1402 = vunpack.c.l.b16 %v1390
      %v1403 = vunpack.c.l.b16 %v1391
      %v1404 = vunpack.c.l.b16 %v1392
      %v1405 = vpack.c.b16 %v1400, %v1399
      %v1406 = vpack.c.b16 %v1402, %v1401
      %v1407 = vpack.c.b16 %v1404, %v1403
      %v1412 = vsel %vm895, %v1382, 0
      %v1415 = vsel %vm895, %v1383, 0
      %v1418 = vsel %vm895, %v1384, 0
      %v1421 = vsel %vm895, %v1385, 0
      %1423 = vmatprep.subr.bf16.mxu0 0
      %1424 = vmatpush1.bf16.msra.mxu0 %v1405
      %1425 = vmatprep.subr.bf16.mxu0 0
      %1426 = vmatpush1.bf16.msra.mxu0 %v1406
      %1427 = vmatprep.subr.bf16.mxu0 0
      %1428 = vmatpush1.bf16.msra.mxu0 %v1407
      %1429 = vmatprep.subr.bf16.mxu0 0
      %1430 = vmatpush1.bf16.msra.mxu0 0
      %1431 = vmatprep.subr.bf16.mxu0 0
      %1432 = vmatpush1.bf16.msra.mxu0 0
      %1433 = vmatprep.subr.bf16.mxu0 0
      %1434 = vmatpush1.bf16.msra.mxu0 0
      %1435 = vmatprep.subr.bf16.mxu0 0
      %1436 = vmatpush1.bf16.msra.mxu0 0
      %1437 = vmatprep.subr.bf16.mxu0 0
      %1438 = vmatpush1.bf16.msra.mxu0 0
      %1439 = vmatprep.subr.bf16.mxu0 0
      %1440 = vmatpush1.bf16.msra.mxu0 0
      %1441 = vmatprep.subr.bf16.mxu0 0
      %1442 = vmatpush1.bf16.msra.mxu0 0
      %1443 = vmatprep.subr.bf16.mxu0 0
      %1444 = vmatpush1.bf16.msra.mxu0 0
      %1445 = vmatprep.subr.bf16.mxu0 0
      %1446 = vmatpush1.bf16.msra.mxu0 0
      %1447 = vmatprep.subr.bf16.mxu0 0
      %1448 = vmatpush1.bf16.msra.mxu0 0
      %1449 = vmatprep.subr.bf16.mxu0 0
      %1450 = vmatpush1.bf16.msra.mxu0 0
      %1451 = vmatprep.subr.bf16.mxu0 0
      %1452 = vmatpush1.bf16.msra.mxu0 0
      %1453 = vmatprep.subr.bf16.mxu0 0
      %1454 = vmatpush1.bf16.msra.mxu0 0
      %1455 = vmatprep.mubr.bf16.mxu0 0
      %1456 = vmatmul.mubr.bf16.gmra.mrb[0].mxu0 %v1412
      %v1457 = vpop.f32.mrb[0].mxu0
      %v1458 = vadd.f32 0.0, %v1457
      %v1459 = vpop.f32.mrb[0].mxu0
      %v1460 = vpop.f32.mrb[0].mxu0
      %v1461 = vadd.f32 0.0, %v1460
      %v1462 = vpop.f32.mrb[0].mxu0
      %1463 = vmatprep.mubr.bf16.mxu0 0
      %1464 = vmatmul.mubr.bf16.gmra.mrb[0].mxu0 %v1415
      %v1465 = vpop.f32.mrb[0].mxu0
      %v1466 = vadd.f32 0.0, %v1465
      %v1467 = vpop.f32.mrb[0].mxu0
      %v1468 = vpop.f32.mrb[0].mxu0
      %v1469 = vadd.f32 0.0, %v1468
      %v1470 = vpop.f32.mrb[0].mxu0
      %1471 = vmatprep.mubr.bf16.mxu0 0
      %1472 = vmatmul.mubr.bf16.gmra.mrb[0].mxu0 %v1418
      %v1473 = vpop.f32.mrb[0].mxu0
      %v1474 = vadd.f32 0.0, %v1473
      %v1475 = vpop.f32.mrb[0].mxu0
      %v1476 = vpop.f32.mrb[0].mxu0
      %v1477 = vadd.f32 0.0, %v1476
      %v1478 = vpop.f32.mrb[0].mxu0
      %1479 = vmatprep.mubr.bf16.mxu0 0
      %1480 = vmatmul.mubr.bf16.gmra.mrb[0].mxu0 %v1421
      %v1481 = vpop.f32.mrb[0].mxu0
      %v1482 = vadd.f32 0.0, %v1481
      %v1483 = vpop.f32.mrb[0].mxu0
      %v1484 = vpop.f32.mrb[0].mxu0
      %v1485 = vpop.f32.mrb[0].mxu0
      %1486 = vdwg.mxu0
      %v1487 = vadd.f32 %v1273, %v1458
      %v1488 = vadd.f32 %v1274, %v1461
      %v1489 = vadd.f32 %v1275, %v1466
      %v1490 = vadd.f32 %v1276, %v1469
      %v1491 = vadd.f32 %v1277, %v1474
      %v1492 = vadd.f32 %v1278, %v1477
      %v1493 = vadd.f32 %v1279, %v1482
      %s1494 = scalar_lea.vmem %s4, 112
      %v1495 = vld [vmem:[%s1494] sm:$0xf]
      %v1496 = vld [vmem:[%s1494 + $0x4] sm:$0xf]
      %v1497 = vld [vmem:[%s1494 + $0x8] sm:$0xf]
      %v1498 = vld [vmem:[%s1494 + $0xc] sm:$0xf]
      %v1499 = vld [vmem:[%s1494 + $0x10] sm:$0xf]
      %v1500 = vld [vmem:[%s1494 + $0x14] sm:$0xf]
      %v1501 = vld [vmem:[%s1494 + $0x18] sm:$0xf]
      %v1509 = vunpack.c.l.b16 %v1495
      %v1510 = vunpack.c.l.b16 %v1496
      %v1511 = vunpack.c.l.b16 %v1497
      %v1512 = vunpack.c.l.b16 %v1498
      %v1513 = vunpack.c.l.b16 %v1499
      %v1514 = vunpack.c.l.b16 %v1500
      %v1515 = vunpack.c.l.b16 %v1501
      %v1516 = vpack.c.b16 %v1510, %v1509
      %v1517 = vpack.c.b16 %v1512, %v1511
      %v1518 = vpack.c.b16 %v1514, %v1513
      %v1519 = vpack.c.b16 %v1515, %v1515
      %v1521 = vsel %vm673, %v1516, 0
      %v1524 = vsel %vm673, %v1517, 0
      %v1527 = vsel %vm673, %v1518, 0
      %v1530 = vsel %vm673, %v1519, 0
      %1532 = vmatprep.subr.bf16.mxu0 0
      %1533 = vmatpush1.bf16.msra.mxu0 %v644
      %1534 = vmatprep.subr.bf16.mxu0 0
      %1535 = vmatpush1.bf16.msra.mxu0 %v645
      %1536 = vmatprep.subr.bf16.mxu0 0
      %1537 = vmatpush1.bf16.msra.mxu0 %v646
      %1538 = vmatprep.subr.bf16.mxu0 0
      %1539 = vmatpush1.bf16.msra.mxu0 %v688
      %1540 = vmatprep.subr.bf16.mxu0 0
      %1541 = vmatpush1.bf16.msra.mxu0 0
      %1542 = vmatprep.subr.bf16.mxu0 0
      %1543 = vmatpush1.bf16.msra.mxu0 0
      %1544 = vmatprep.subr.bf16.mxu0 0
      %1545 = vmatpush1.bf16.msra.mxu0 0
      %1546 = vmatprep.subr.bf16.mxu0 0
      %1547 = vmatpush1.bf16.msra.mxu0 0
      %1548 = vmatprep.subr.bf16.mxu0 0
      %1549 = vmatpush1.bf16.msra.mxu0 0
      %1550 = vmatprep.subr.bf16.mxu0 0
      %1551 = vmatpush1.bf16.msra.mxu0 0
      %1552 = vmatprep.subr.bf16.mxu0 0
      %1553 = vmatpush1.bf16.msra.mxu0 0
      %1554 = vmatprep.subr.bf16.mxu0 0
      %1555 = vmatpush1.bf16.msra.mxu0 0
      %1556 = vmatprep.subr.bf16.mxu0 0
      %1557 = vmatpush1.bf16.msra.mxu0 0
      %1558 = vmatprep.subr.bf16.mxu0 0
      %1559 = vmatpush1.bf16.msra.mxu0 0
      %1560 = vmatprep.subr.bf16.mxu0 0
      %1561 = vmatpush1.bf16.msra.mxu0 0
      %1562 = vmatprep.subr.bf16.mxu0 0
      %1563 = vmatpush1.bf16.msra.mxu0 0
      %1564 = vmatprep.mubr.bf16.mxu0 0
      %1565 = vmatmul.mubr.bf16.gmra.mrb[0].mxu0 %v1521
      %v1566 = vpop.f32.mrb[0].mxu0
      %v1567 = vadd.f32 0.0, %v1566
      %v1568 = vpop.f32.mrb[0].mxu0
      %v1569 = vpop.f32.mrb[0].mxu0
      %v1570 = vadd.f32 0.0, %v1569
      %v1571 = vpop.f32.mrb[0].mxu0
      %1572 = vmatprep.mubr.bf16.mxu0 0
      %1573 = vmatmul.mubr.bf16.gmra.mrb[0].mxu0 %v1524
      %v1574 = vpop.f32.mrb[0].mxu0
      %v1575 = vadd.f32 0.0, %v1574
      %v1576 = vpop.f32.mrb[0].mxu0
      %v1577 = vpop.f32.mrb[0].mxu0
      %v1578 = vadd.f32 0.0, %v1577
      %v1579 = vpop.f32.mrb[0].mxu0
      %1580 = vmatprep.mubr.bf16.mxu0 0
      %1581 = vmatmul.mubr.bf16.gmra.mrb[0].mxu0 %v1527
      %v1582 = vpop.f32.mrb[0].mxu0
      %v1583 = vadd.f32 0.0, %v1582
      %v1584 = vpop.f32.mrb[0].mxu0
      %v1585 = vpop.f32.mrb[0].mxu0
      %v1586 = vadd.f32 0.0, %v1585
      %v1587 = vpop.f32.mrb[0].mxu0
      %1588 = vmatprep.mubr.bf16.mxu0 0
      %1589 = vmatmul.mubr.bf16.gmra.mrb[0].mxu0 %v1530
      %v1590 = vpop.f32.mrb[0].mxu0
      %v1591 = vadd.f32 0.0, %v1590
      %v1592 = vpop.f32.mrb[0].mxu0
      %v1593 = vpop.f32.mrb[0].mxu0
      %v1594 = vpop.f32.mrb[0].mxu0
      %1595 = vdwg.mxu0
      %v1596 = vpack.c.bf16 %v1570, %v1567
      %v1597 = vpack.c.bf16 %v1578, %v1575
      %v1598 = vpack.c.bf16 %v1586, %v1583
      %v1599 = vpack.c.bf16 %v1591, %v1591
      %s1600 = scalar_lea.vmem %s3, 96
      %v1601 = vld [vmem:[%s1600] sm:$0xf]
      %v1602 = vld [vmem:[%s1600 + $0x4] sm:$0xf]
      %v1603 = vld [vmem:[%s1600 + $0x8] sm:$0xf]
      %v1604 = vld [vmem:[%s1600 + $0xc] sm:$0xf]
      %v1605 = vld [vmem:[%s1600 + $0x10] sm:$0xf]
      %v1606 = vld [vmem:[%s1600 + $0x14] sm:$0xf]
      %v1613 = vunpack.c.l.b16 %v1601
      %v1614 = vunpack.c.l.b16 %v1602
      %v1615 = vunpack.c.l.b16 %v1603
      %v1616 = vunpack.c.l.b16 %v1604
      %v1617 = vunpack.c.l.b16 %v1605
      %v1618 = vunpack.c.l.b16 %v1606
      %v1619 = vpack.c.b16 %v1614, %v1613
      %v1620 = vpack.c.b16 %v1616, %v1615
      %v1621 = vpack.c.b16 %v1618, %v1617
      %v1626 = vsel %vm895, %v1596, 0
      %v1629 = vsel %vm895, %v1597, 0
      %v1632 = vsel %vm895, %v1598, 0
      %v1635 = vsel %vm895, %v1599, 0
      %1637 = vmatprep.subr.bf16.mxu0 0
      %1638 = vmatpush1.bf16.msra.mxu0 %v1619
      %1639 = vmatprep.subr.bf16.mxu0 0
      %1640 = vmatpush1.bf16.msra.mxu0 %v1620
      %1641 = vmatprep.subr.bf16.mxu0 0
      %1642 = vmatpush1.bf16.msra.mxu0 %v1621
      %1643 = vmatprep.subr.bf16.mxu0 0
      %1644 = vmatpush1.bf16.msra.mxu0 0
      %1645 = vmatprep.subr.bf16.mxu0 0
      %1646 = vmatpush1.bf16.msra.mxu0 0
      %1647 = vmatprep.subr.bf16.mxu0 0
      %1648 = vmatpush1.bf16.msra.mxu0 0
      %1649 = vmatprep.subr.bf16.mxu0 0
      %1650 = vmatpush1.bf16.msra.mxu0 0
      %1651 = vmatprep.subr.bf16.mxu0 0
      %1652 = vmatpush1.bf16.msra.mxu0 0
      %1653 = vmatprep.subr.bf16.mxu0 0
      %1654 = vmatpush1.bf16.msra.mxu0 0
      %1655 = vmatprep.subr.bf16.mxu0 0
      %1656 = vmatpush1.bf16.msra.mxu0 0
      %1657 = vmatprep.subr.bf16.mxu0 0
      %1658 = vmatpush1.bf16.msra.mxu0 0
      %1659 = vmatprep.subr.bf16.mxu0 0
      %1660 = vmatpush1.bf16.msra.mxu0 0
      %1661 = vmatprep.subr.bf16.mxu0 0
      %1662 = vmatpush1.bf16.msra.mxu0 0
      %1663 = vmatprep.subr.bf16.mxu0 0
      %1664 = vmatpush1.bf16.msra.mxu0 0
      %1665 = vmatprep.subr.bf16.mxu0 0
      %1666 = vmatpush1.bf16.msra.mxu0 0
      %1667 = vmatprep.subr.bf16.mxu0 0
      %1668 = vmatpush1.bf16.msra.mxu0 0
      %1669 = vmatprep.mubr.bf16.mxu0 0
      %1670 = vmatmul.mubr.bf16.gmra.mrb[0].mxu0 %v1626
      %v1671 = vpop.f32.mrb[0].mxu0
      %v1672 = vadd.f32 0.0, %v1671
      %v1673 = vpop.f32.mrb[0].mxu0
      %v1674 = vpop.f32.mrb[0].mxu0
      %v1675 = vadd.f32 0.0, %v1674
      %v1676 = vpop.f32.mrb[0].mxu0
      %1677 = vmatprep.mubr.bf16.mxu0 0
      %1678 = vmatmul.mubr.bf16.gmra.mrb[0].mxu0 %v1629
      %v1679 = vpop.f32.mrb[0].mxu0
      %v1680 = vadd.f32 0.0, %v1679
      %v1681 = vpop.f32.mrb[0].mxu0
      %v1682 = vpop.f32.mrb[0].mxu0
      %v1683 = vadd.f32 0.0, %v1682
      %v1684 = vpop.f32.mrb[0].mxu0
      %1685 = vmatprep.mubr.bf16.mxu0 0
      %1686 = vmatmul.mubr.bf16.gmra.mrb[0].mxu0 %v1632
      %v1687 = vpop.f32.mrb[0].mxu0
      %v1688 = vadd.f32 0.0, %v1687
      %v1689 = vpop.f32.mrb[0].mxu0
      %v1690 = vpop.f32.mrb[0].mxu0
      %v1691 = vadd.f32 0.0, %v1690
      %v1692 = vpop.f32.mrb[0].mxu0
      %1693 = vmatprep.mubr.bf16.mxu0 0
      %1694 = vmatmul.mubr.bf16.gmra.mrb[0].mxu0 %v1635
      %v1695 = vpop.f32.mrb[0].mxu0
      %v1696 = vadd.f32 0.0, %v1695
      %v1697 = vpop.f32.mrb[0].mxu0
      %v1698 = vpop.f32.mrb[0].mxu0
      %v1699 = vpop.f32.mrb[0].mxu0
      %1700 = vdwg.mxu0
      %v1701 = vadd.f32 %v1487, %v1672
      %v1702 = vadd.f32 %v1488, %v1675
      %v1703 = vadd.f32 %v1489, %v1680
      %v1704 = vadd.f32 %v1490, %v1683
      %v1705 = vadd.f32 %v1491, %v1688
      %v1706 = vadd.f32 %v1492, %v1691
      %v1707 = vadd.f32 %v1493, %v1696
      %s1708 = scalar_lea.vmem %s4, 140
      %v1709 = vld [vmem:[%s1708] sm:$0xf]
      %v1710 = vld [vmem:[%s1708 + $0x4] sm:$0xf]
      %v1711 = vld [vmem:[%s1708 + $0x8] sm:$0xf]
      %v1712 = vld [vmem:[%s1708 + $0xc] sm:$0xf]
      %v1713 = vld [vmem:[%s1708 + $0x10] sm:$0xf]
      %v1714 = vld [vmem:[%s1708 + $0x14] sm:$0xf]
      %v1715 = vld [vmem:[%s1708 + $0x18] sm:$0xf]
      %v1723 = vunpack.c.l.b16 %v1709
      %v1724 = vunpack.c.l.b16 %v1710
      %v1725 = vunpack.c.l.b16 %v1711
      %v1726 = vunpack.c.l.b16 %v1712
      %v1727 = vunpack.c.l.b16 %v1713
      %v1728 = vunpack.c.l.b16 %v1714
      %v1729 = vunpack.c.l.b16 %v1715
      %v1730 = vpack.c.b16 %v1724, %v1723
      %v1731 = vpack.c.b16 %v1726, %v1725
      %v1732 = vpack.c.b16 %v1728, %v1727
      %v1733 = vpack.c.b16 %v1729, %v1729
      %v1735 = vsel %vm673, %v1730, 0
      %v1738 = vsel %vm673, %v1731, 0
      %v1741 = vsel %vm673, %v1732, 0
      %v1744 = vsel %vm673, %v1733, 0
      %1746 = vmatprep.subr.bf16.mxu0 0
      %1747 = vmatpush1.bf16.msra.mxu0 %v644
      %1748 = vmatprep.subr.bf16.mxu0 0
      %1749 = vmatpush1.bf16.msra.mxu0 %v645
      %1750 = vmatprep.subr.bf16.mxu0 0
      %1751 = vmatpush1.bf16.msra.mxu0 %v646
      %1752 = vmatprep.subr.bf16.mxu0 0
      %1753 = vmatpush1.bf16.msra.mxu0 %v688
      %1754 = vmatprep.subr.bf16.mxu0 0
      %1755 = vmatpush1.bf16.msra.mxu0 0
      %1756 = vmatprep.subr.bf16.mxu0 0
      %1757 = vmatpush1.bf16.msra.mxu0 0
      %1758 = vmatprep.subr.bf16.mxu0 0
      %1759 = vmatpush1.bf16.msra.mxu0 0
      %1760 = vmatprep.subr.bf16.mxu0 0
      %1761 = vmatpush1.bf16.msra.mxu0 0
      %1762 = vmatprep.subr.bf16.mxu0 0
      %1763 = vmatpush1.bf16.msra.mxu0 0
      %1764 = vmatprep.subr.bf16.mxu0 0
      %1765 = vmatpush1.bf16.msra.mxu0 0
      %1766 = vmatprep.subr.bf16.mxu0 0
      %1767 = vmatpush1.bf16.msra.mxu0 0
      %1768 = vmatprep.subr.bf16.mxu0 0
      %1769 = vmatpush1.bf16.msra.mxu0 0
      %1770 = vmatprep.subr.bf16.mxu0 0
      %1771 = vmatpush1.bf16.msra.mxu0 0
      %1772 = vmatprep.subr.bf16.mxu0 0
      %1773 = vmatpush1.bf16.msra.mxu0 0
      %1774 = vmatprep.subr.bf16.mxu0 0
      %1775 = vmatpush1.bf16.msra.mxu0 0
      %1776 = vmatprep.subr.bf16.mxu0 0
      %1777 = vmatpush1.bf16.msra.mxu0 0
      %1778 = vmatprep.mubr.bf16.mxu0 0
      %1779 = vmatmul.mubr.bf16.gmra.mrb[0].mxu0 %v1735
      %v1780 = vpop.f32.mrb[0].mxu0
      %v1781 = vadd.f32 0.0, %v1780
      %v1782 = vpop.f32.mrb[0].mxu0
      %v1783 = vpop.f32.mrb[0].mxu0
      %v1784 = vadd.f32 0.0, %v1783
      %v1785 = vpop.f32.mrb[0].mxu0
      %1786 = vmatprep.mubr.bf16.mxu0 0
      %1787 = vmatmul.mubr.bf16.gmra.mrb[0].mxu0 %v1738
      %v1788 = vpop.f32.mrb[0].mxu0
      %v1789 = vadd.f32 0.0, %v1788
      %v1790 = vpop.f32.mrb[0].mxu0
      %v1791 = vpop.f32.mrb[0].mxu0
      %v1792 = vadd.f32 0.0, %v1791
      %v1793 = vpop.f32.mrb[0].mxu0
      %1794 = vmatprep.mubr.bf16.mxu0 0
      %1795 = vmatmul.mubr.bf16.gmra.mrb[0].mxu0 %v1741
      %v1796 = vpop.f32.mrb[0].mxu0
      %v1797 = vadd.f32 0.0, %v1796
      %v1798 = vpop.f32.mrb[0].mxu0
      %v1799 = vpop.f32.mrb[0].mxu0
      %v1800 = vadd.f32 0.0, %v1799
      %v1801 = vpop.f32.mrb[0].mxu0
      %1802 = vmatprep.mubr.bf16.mxu0 0
      %1803 = vmatmul.mubr.bf16.gmra.mrb[0].mxu0 %v1744
      %v1804 = vpop.f32.mrb[0].mxu0
      %v1805 = vadd.f32 0.0, %v1804
      %v1806 = vpop.f32.mrb[0].mxu0
      %v1807 = vpop.f32.mrb[0].mxu0
      %v1808 = vpop.f32.mrb[0].mxu0
      %1809 = vdwg.mxu0
      %v1810 = vpack.c.bf16 %v1784, %v1781
      %v1811 = vpack.c.bf16 %v1792, %v1789
      %v1812 = vpack.c.bf16 %v1800, %v1797
      %v1813 = vpack.c.bf16 %v1805, %v1805
      %s1814 = scalar_lea.vmem %s3, 120
      %v1815 = vld [vmem:[%s1814] sm:$0xf]
      %v1816 = vld [vmem:[%s1814 + $0x4] sm:$0xf]
      %v1817 = vld [vmem:[%s1814 + $0x8] sm:$0xf]
      %v1818 = vld [vmem:[%s1814 + $0xc] sm:$0xf]
      %v1819 = vld [vmem:[%s1814 + $0x10] sm:$0xf]
      %v1820 = vld [vmem:[%s1814 + $0x14] sm:$0xf]
      %v1827 = vunpack.c.l.b16 %v1815
      %v1828 = vunpack.c.l.b16 %v1816
      %v1829 = vunpack.c.l.b16 %v1817
      %v1830 = vunpack.c.l.b16 %v1818
      %v1831 = vunpack.c.l.b16 %v1819
      %v1832 = vunpack.c.l.b16 %v1820
      %v1833 = vpack.c.b16 %v1828, %v1827
      %v1834 = vpack.c.b16 %v1830, %v1829
      %v1835 = vpack.c.b16 %v1832, %v1831
      %v1840 = vsel %vm895, %v1810, 0
      %v1843 = vsel %vm895, %v1811, 0
      %v1846 = vsel %vm895, %v1812, 0
      %v1849 = vsel %vm895, %v1813, 0
      %1851 = vmatprep.subr.bf16.mxu0 0
      %1852 = vmatpush1.bf16.msra.mxu0 %v1833
      %1853 = vmatprep.subr.bf16.mxu0 0
      %1854 = vmatpush1.bf16.msra.mxu0 %v1834
      %1855 = vmatprep.subr.bf16.mxu0 0
      %1856 = vmatpush1.bf16.msra.mxu0 %v1835
      %1857 = vmatprep.subr.bf16.mxu0 0
      %1858 = vmatpush1.bf16.msra.mxu0 0
      %1859 = vmatprep.subr.bf16.mxu0 0
      %1860 = vmatpush1.bf16.msra.mxu0 0
      %1861 = vmatprep.subr.bf16.mxu0 0
      %1862 = vmatpush1.bf16.msra.mxu0 0
      %1863 = vmatprep.subr.bf16.mxu0 0
      %1864 = vmatpush1.bf16.msra.mxu0 0
      %1865 = vmatprep.subr.bf16.mxu0 0
      %1866 = vmatpush1.bf16.msra.mxu0 0
      %1867 = vmatprep.subr.bf16.mxu0 0
      %1868 = vmatpush1.bf16.msra.mxu0 0
      %1869 = vmatprep.subr.bf16.mxu0 0
      %1870 = vmatpush1.bf16.msra.mxu0 0
      %1871 = vmatprep.subr.bf16.mxu0 0
      %1872 = vmatpush1.bf16.msra.mxu0 0
      %1873 = vmatprep.subr.bf16.mxu0 0
      %1874 = vmatpush1.bf16.msra.mxu0 0
      %1875 = vmatprep.subr.bf16.mxu0 0
      %1876 = vmatpush1.bf16.msra.mxu0 0
      %1877 = vmatprep.subr.bf16.mxu0 0
      %1878 = vmatpush1.bf16.msra.mxu0 0
      %1879 = vmatprep.subr.bf16.mxu0 0
      %1880 = vmatpush1.bf16.msra.mxu0 0
      %1881 = vmatprep.subr.bf16.mxu0 0
      %1882 = vmatpush1.bf16.msra.mxu0 0
      %1883 = vmatprep.mubr.bf16.mxu0 0
      %1884 = vmatmul.mubr.bf16.gmra.mrb[0].mxu0 %v1840
      %v1885 = vpop.f32.mrb[0].mxu0
      %v1886 = vadd.f32 0.0, %v1885
      %v1887 = vpop.f32.mrb[0].mxu0
      %v1888 = vpop.f32.mrb[0].mxu0
      %v1889 = vadd.f32 0.0, %v1888
      %v1890 = vpop.f32.mrb[0].mxu0
      %1891 = vmatprep.mubr.bf16.mxu0 0
      %1892 = vmatmul.mubr.bf16.gmra.mrb[0].mxu0 %v1843
      %v1893 = vpop.f32.mrb[0].mxu0
      %v1894 = vadd.f32 0.0, %v1893
      %v1895 = vpop.f32.mrb[0].mxu0
      %v1896 = vpop.f32.mrb[0].mxu0
      %v1897 = vadd.f32 0.0, %v1896
      %v1898 = vpop.f32.mrb[0].mxu0
      %1899 = vmatprep.mubr.bf16.mxu0 0
      %1900 = vmatmul.mubr.bf16.gmra.mrb[0].mxu0 %v1846
      %v1901 = vpop.f32.mrb[0].mxu0
      %v1902 = vadd.f32 0.0, %v1901
      %v1903 = vpop.f32.mrb[0].mxu0
      %v1904 = vpop.f32.mrb[0].mxu0
      %v1905 = vadd.f32 0.0, %v1904
      %v1906 = vpop.f32.mrb[0].mxu0
      %1907 = vmatprep.mubr.bf16.mxu0 0
      %1908 = vmatmul.mubr.bf16.gmra.mrb[0].mxu0 %v1849
      %v1909 = vpop.f32.mrb[0].mxu0
      %v1910 = vadd.f32 0.0, %v1909
      %v1911 = vpop.f32.mrb[0].mxu0
      %v1912 = vpop.f32.mrb[0].mxu0
      %v1913 = vpop.f32.mrb[0].mxu0
      %1914 = vdwg.mxu0
      %v1915 = vadd.f32 %v1701, %v1886
      %v1916 = vadd.f32 %v1702, %v1889
      %v1917 = vadd.f32 %v1703, %v1894
      %v1918 = vadd.f32 %v1704, %v1897
      %v1919 = vadd.f32 %v1705, %v1902
      %v1920 = vadd.f32 %v1706, %v1905
      %v1921 = vadd.f32 %v1707, %v1910
      %s1922 = scalar_lea.vmem %s4, 168
      %v1923 = vld [vmem:[%s1922] sm:$0xf]
      %v1924 = vld [vmem:[%s1922 + $0x4] sm:$0xf]
      %v1925 = vld [vmem:[%s1922 + $0x8] sm:$0xf]
      %v1926 = vld [vmem:[%s1922 + $0xc] sm:$0xf]
      %v1927 = vld [vmem:[%s1922 + $0x10] sm:$0xf]
      %v1928 = vld [vmem:[%s1922 + $0x14] sm:$0xf]
      %v1929 = vld [vmem:[%s1922 + $0x18] sm:$0xf]
      %v1937 = vunpack.c.l.b16 %v1923
      %v1938 = vunpack.c.l.b16 %v1924
      %v1939 = vunpack.c.l.b16 %v1925
      %v1940 = vunpack.c.l.b16 %v1926
      %v1941 = vunpack.c.l.b16 %v1927
      %v1942 = vunpack.c.l.b16 %v1928
      %v1943 = vunpack.c.l.b16 %v1929
      %v1944 = vpack.c.b16 %v1938, %v1937
      %v1945 = vpack.c.b16 %v1940, %v1939
      %v1946 = vpack.c.b16 %v1942, %v1941
      %v1947 = vpack.c.b16 %v1943, %v1943
      %v1949 = vsel %vm673, %v1944, 0
      %v1952 = vsel %vm673, %v1945, 0
      %v1955 = vsel %vm673, %v1946, 0
      %v1958 = vsel %vm673, %v1947, 0
      %1960 = vmatprep.subr.bf16.mxu0 0
      %1961 = vmatpush1.bf16.msra.mxu0 %v644
      %1962 = vmatprep.subr.bf16.mxu0 0
      %1963 = vmatpush1.bf16.msra.mxu0 %v645
      %1964 = vmatprep.subr.bf16.mxu0 0
      %1965 = vmatpush1.bf16.msra.mxu0 %v646
      %1966 = vmatprep.subr.bf16.mxu0 0
      %1967 = vmatpush1.bf16.msra.mxu0 %v688
      %1968 = vmatprep.subr.bf16.mxu0 0
      %1969 = vmatpush1.bf16.msra.mxu0 0
      %1970 = vmatprep.subr.bf16.mxu0 0
      %1971 = vmatpush1.bf16.msra.mxu0 0
      %1972 = vmatprep.subr.bf16.mxu0 0
      %1973 = vmatpush1.bf16.msra.mxu0 0
      %1974 = vmatprep.subr.bf16.mxu0 0
      %1975 = vmatpush1.bf16.msra.mxu0 0
      %1976 = vmatprep.subr.bf16.mxu0 0
      %1977 = vmatpush1.bf16.msra.mxu0 0
      %1978 = vmatprep.subr.bf16.mxu0 0
      %1979 = vmatpush1.bf16.msra.mxu0 0
      %1980 = vmatprep.subr.bf16.mxu0 0
      %1981 = vmatpush1.bf16.msra.mxu0 0
      %1982 = vmatprep.subr.bf16.mxu0 0
      %1983 = vmatpush1.bf16.msra.mxu0 0
      %1984 = vmatprep.subr.bf16.mxu0 0
      %1985 = vmatpush1.bf16.msra.mxu0 0
      %1986 = vmatprep.subr.bf16.mxu0 0
      %1987 = vmatpush1.bf16.msra.mxu0 0
      %1988 = vmatprep.subr.bf16.mxu0 0
      %1989 = vmatpush1.bf16.msra.mxu0 0
      %1990 = vmatprep.subr.bf16.mxu0 0
      %1991 = vmatpush1.bf16.msra.mxu0 0
      %1992 = vmatprep.mubr.bf16.mxu0 0
      %1993 = vmatmul.mubr.bf16.gmra.mrb[0].mxu0 %v1949
      %v1994 = vpop.f32.mrb[0].mxu0
      %v1995 = vadd.f32 0.0, %v1994
      %v1996 = vpop.f32.mrb[0].mxu0
      %v1997 = vpop.f32.mrb[0].mxu0
      %v1998 = vadd.f32 0.0, %v1997
      %v1999 = vpop.f32.mrb[0].mxu0
      %2000 = vmatprep.mubr.bf16.mxu0 0
      %2001 = vmatmul.mubr.bf16.gmra.mrb[0].mxu0 %v1952
      %v2002 = vpop.f32.mrb[0].mxu0
      %v2003 = vadd.f32 0.0, %v2002
      %v2004 = vpop.f32.mrb[0].mxu0
      %v2005 = vpop.f32.mrb[0].mxu0
      %v2006 = vadd.f32 0.0, %v2005
      %v2007 = vpop.f32.mrb[0].mxu0
      %2008 = vmatprep.mubr.bf16.mxu0 0
      %2009 = vmatmul.mubr.bf16.gmra.mrb[0].mxu0 %v1955
      %v2010 = vpop.f32.mrb[0].mxu0
      %v2011 = vadd.f32 0.0, %v2010
      %v2012 = vpop.f32.mrb[0].mxu0
      %v2013 = vpop.f32.mrb[0].mxu0
      %v2014 = vadd.f32 0.0, %v2013
      %v2015 = vpop.f32.mrb[0].mxu0
      %2016 = vmatprep.mubr.bf16.mxu0 0
      %2017 = vmatmul.mubr.bf16.gmra.mrb[0].mxu0 %v1958
      %v2018 = vpop.f32.mrb[0].mxu0
      %v2019 = vadd.f32 0.0, %v2018
      %v2020 = vpop.f32.mrb[0].mxu0
      %v2021 = vpop.f32.mrb[0].mxu0
      %v2022 = vpop.f32.mrb[0].mxu0
      %2023 = vdwg.mxu0
      %v2024 = vpack.c.bf16 %v1998, %v1995
      %v2025 = vpack.c.bf16 %v2006, %v2003
      %v2026 = vpack.c.bf16 %v2014, %v2011
      %v2027 = vpack.c.bf16 %v2019, %v2019
      %s2028 = scalar_lea.vmem %s3, 144
      %v2029 = vld [vmem:[%s2028] sm:$0xf]
      %v2030 = vld [vmem:[%s2028 + $0x4] sm:$0xf]
      %v2031 = vld [vmem:[%s2028 + $0x8] sm:$0xf]
      %v2032 = vld [vmem:[%s2028 + $0xc] sm:$0xf]
      %v2033 = vld [vmem:[%s2028 + $0x10] sm:$0xf]
      %v2034 = vld [vmem:[%s2028 + $0x14] sm:$0xf]
      %v2041 = vunpack.c.l.b16 %v2029
      %v2042 = vunpack.c.l.b16 %v2030
      %v2043 = vunpack.c.l.b16 %v2031
      %v2044 = vunpack.c.l.b16 %v2032
      %v2045 = vunpack.c.l.b16 %v2033
      %v2046 = vunpack.c.l.b16 %v2034
      %v2047 = vpack.c.b16 %v2042, %v2041
      %v2048 = vpack.c.b16 %v2044, %v2043
      %v2049 = vpack.c.b16 %v2046, %v2045
      %v2054 = vsel %vm895, %v2024, 0
      %v2057 = vsel %vm895, %v2025, 0
      %v2060 = vsel %vm895, %v2026, 0
      %v2063 = vsel %vm895, %v2027, 0
      %2065 = vmatprep.subr.bf16.mxu0 0
      %2066 = vmatpush1.bf16.msra.mxu0 %v2047
      %2067 = vmatprep.subr.bf16.mxu0 0
      %2068 = vmatpush1.bf16.msra.mxu0 %v2048
      %2069 = vmatprep.subr.bf16.mxu0 0
      %2070 = vmatpush1.bf16.msra.mxu0 %v2049
      %2071 = vmatprep.subr.bf16.mxu0 0
      %2072 = vmatpush1.bf16.msra.mxu0 0
      %2073 = vmatprep.subr.bf16.mxu0 0
      %2074 = vmatpush1.bf16.msra.mxu0 0
      %2075 = vmatprep.subr.bf16.mxu0 0
      %2076 = vmatpush1.bf16.msra.mxu0 0
      %2077 = vmatprep.subr.bf16.mxu0 0
      %2078 = vmatpush1.bf16.msra.mxu0 0
      %2079 = vmatprep.subr.bf16.mxu0 0
      %2080 = vmatpush1.bf16.msra.mxu0 0
      %2081 = vmatprep.subr.bf16.mxu0 0
      %2082 = vmatpush1.bf16.msra.mxu0 0
      %2083 = vmatprep.subr.bf16.mxu0 0
      %2084 = vmatpush1.bf16.msra.mxu0 0
      %2085 = vmatprep.subr.bf16.mxu0 0
      %2086 = vmatpush1.bf16.msra.mxu0 0
      %2087 = vmatprep.subr.bf16.mxu0 0
      %2088 = vmatpush1.bf16.msra.mxu0 0
      %2089 = vmatprep.subr.bf16.mxu0 0
      %2090 = vmatpush1.bf16.msra.mxu0 0
      %2091 = vmatprep.subr.bf16.mxu0 0
      %2092 = vmatpush1.bf16.msra.mxu0 0
      %2093 = vmatprep.subr.bf16.mxu0 0
      %2094 = vmatpush1.bf16.msra.mxu0 0
      %2095 = vmatprep.subr.bf16.mxu0 0
      %2096 = vmatpush1.bf16.msra.mxu0 0
      %2097 = vmatprep.mubr.bf16.mxu0 0
      %2098 = vmatmul.mubr.bf16.gmra.mrb[0].mxu0 %v2054
      %v2099 = vpop.f32.mrb[0].mxu0
      %v2100 = vadd.f32 0.0, %v2099
      %v2101 = vpop.f32.mrb[0].mxu0
      %v2102 = vpop.f32.mrb[0].mxu0
      %v2103 = vadd.f32 0.0, %v2102
      %v2104 = vpop.f32.mrb[0].mxu0
      %2105 = vmatprep.mubr.bf16.mxu0 0
      %2106 = vmatmul.mubr.bf16.gmra.mrb[0].mxu0 %v2057
      %v2107 = vpop.f32.mrb[0].mxu0
      %v2108 = vadd.f32 0.0, %v2107
      %v2109 = vpop.f32.mrb[0].mxu0
      %v2110 = vpop.f32.mrb[0].mxu0
      %v2111 = vadd.f32 0.0, %v2110
      %v2112 = vpop.f32.mrb[0].mxu0
      %2113 = vmatprep.mubr.bf16.mxu0 0
      %2114 = vmatmul.mubr.bf16.gmra.mrb[0].mxu0 %v2060
      %v2115 = vpop.f32.mrb[0].mxu0
      %v2116 = vadd.f32 0.0, %v2115
      %v2117 = vpop.f32.mrb[0].mxu0
      %v2118 = vpop.f32.mrb[0].mxu0
      %v2119 = vadd.f32 0.0, %v2118
      %v2120 = vpop.f32.mrb[0].mxu0
      %2121 = vmatprep.mubr.bf16.mxu0 0
      %2122 = vmatmul.mubr.bf16.gmra.mrb[0].mxu0 %v2063
      %v2123 = vpop.f32.mrb[0].mxu0
      %v2124 = vadd.f32 0.0, %v2123
      %v2125 = vpop.f32.mrb[0].mxu0
      %v2126 = vpop.f32.mrb[0].mxu0
      %v2127 = vpop.f32.mrb[0].mxu0
      %2128 = vdwg.mxu0
      %v2129 = vadd.f32 %v1915, %v2100
      %v2130 = vadd.f32 %v1916, %v2103
      %v2131 = vadd.f32 %v1917, %v2108
      %v2132 = vadd.f32 %v1918, %v2111
      %v2133 = vadd.f32 %v1919, %v2116
      %v2134 = vadd.f32 %v1920, %v2119
      %v2135 = vadd.f32 %v1921, %v2124
      %s2136 = scalar_lea.vmem %s4, 196
      %v2137 = vld [vmem:[%s2136] sm:$0xf]
      %v2138 = vld [vmem:[%s2136 + $0x4] sm:$0xf]
      %v2139 = vld [vmem:[%s2136 + $0x8] sm:$0xf]
      %v2140 = vld [vmem:[%s2136 + $0xc] sm:$0xf]
      %v2141 = vld [vmem:[%s2136 + $0x10] sm:$0xf]
      %v2142 = vld [vmem:[%s2136 + $0x14] sm:$0xf]
      %v2143 = vld [vmem:[%s2136 + $0x18] sm:$0xf]
      %v2151 = vunpack.c.l.b16 %v2137
      %v2152 = vunpack.c.l.b16 %v2138
      %v2153 = vunpack.c.l.b16 %v2139
      %v2154 = vunpack.c.l.b16 %v2140
      %v2155 = vunpack.c.l.b16 %v2141
      %v2156 = vunpack.c.l.b16 %v2142
      %v2157 = vunpack.c.l.b16 %v2143
      %v2158 = vpack.c.b16 %v2152, %v2151
      %v2159 = vpack.c.b16 %v2154, %v2153
      %v2160 = vpack.c.b16 %v2156, %v2155
      %v2161 = vpack.c.b16 %v2157, %v2157
      %v2163 = vsel %vm673, %v2158, 0
      %v2166 = vsel %vm673, %v2159, 0
      %v2169 = vsel %vm673, %v2160, 0
      %v2172 = vsel %vm673, %v2161, 0
      %2174 = vmatprep.subr.bf16.mxu0 0
      %2175 = vmatpush1.bf16.msra.mxu0 %v644
      %2176 = vmatprep.subr.bf16.mxu0 0
      %2177 = vmatpush1.bf16.msra.mxu0 %v645
      %2178 = vmatprep.subr.bf16.mxu0 0
      %2179 = vmatpush1.bf16.msra.mxu0 %v646
      %2180 = vmatprep.subr.bf16.mxu0 0
      %2181 = vmatpush1.bf16.msra.mxu0 %v688
      %2182 = vmatprep.subr.bf16.mxu0 0
      %2183 = vmatpush1.bf16.msra.mxu0 0
      %2184 = vmatprep.subr.bf16.mxu0 0
      %2185 = vmatpush1.bf16.msra.mxu0 0
      %2186 = vmatprep.subr.bf16.mxu0 0
      %2187 = vmatpush1.bf16.msra.mxu0 0
      %2188 = vmatprep.subr.bf16.mxu0 0
      %2189 = vmatpush1.bf16.msra.mxu0 0
      %2190 = vmatprep.subr.bf16.mxu0 0
      %2191 = vmatpush1.bf16.msra.mxu0 0
      %2192 = vmatprep.subr.bf16.mxu0 0
      %2193 = vmatpush1.bf16.msra.mxu0 0
      %2194 = vmatprep.subr.bf16.mxu0 0
      %2195 = vmatpush1.bf16.msra.mxu0 0
      %2196 = vmatprep.subr.bf16.mxu0 0
      %2197 = vmatpush1.bf16.msra.mxu0 0
      %2198 = vmatprep.subr.bf16.mxu0 0
      %2199 = vmatpush1.bf16.msra.mxu0 0
      %2200 = vmatprep.subr.bf16.mxu0 0
      %2201 = vmatpush1.bf16.msra.mxu0 0
      %2202 = vmatprep.subr.bf16.mxu0 0
      %2203 = vmatpush1.bf16.msra.mxu0 0
      %2204 = vmatprep.subr.bf16.mxu0 0
      %2205 = vmatpush1.bf16.msra.mxu0 0
      %2206 = vmatprep.mubr.bf16.mxu0 0
      %2207 = vmatmul.mubr.bf16.gmra.mrb[0].mxu0 %v2163
      %v2208 = vpop.f32.mrb[0].mxu0
      %v2209 = vadd.f32 0.0, %v2208
      %v2210 = vpop.f32.mrb[0].mxu0
      %v2211 = vpop.f32.mrb[0].mxu0
      %v2212 = vadd.f32 0.0, %v2211
      %v2213 = vpop.f32.mrb[0].mxu0
      %2214 = vmatprep.mubr.bf16.mxu0 0
      %2215 = vmatmul.mubr.bf16.gmra.mrb[0].mxu0 %v2166
      %v2216 = vpop.f32.mrb[0].mxu0
      %v2217 = vadd.f32 0.0, %v2216
      %v2218 = vpop.f32.mrb[0].mxu0
      %v2219 = vpop.f32.mrb[0].mxu0
      %v2220 = vadd.f32 0.0, %v2219
      %v2221 = vpop.f32.mrb[0].mxu0
      %2222 = vmatprep.mubr.bf16.mxu0 0
      %2223 = vmatmul.mubr.bf16.gmra.mrb[0].mxu0 %v2169
      %v2224 = vpop.f32.mrb[0].mxu0
      %v2225 = vadd.f32 0.0, %v2224
      %v2226 = vpop.f32.mrb[0].mxu0
      %v2227 = vpop.f32.mrb[0].mxu0
      %v2228 = vadd.f32 0.0, %v2227
      %v2229 = vpop.f32.mrb[0].mxu0
      %2230 = vmatprep.mubr.bf16.mxu0 0
      %2231 = vmatmul.mubr.bf16.gmra.mrb[0].mxu0 %v2172
      %v2232 = vpop.f32.mrb[0].mxu0
      %v2233 = vadd.f32 0.0, %v2232
      %v2234 = vpop.f32.mrb[0].mxu0
      %v2235 = vpop.f32.mrb[0].mxu0
      %v2236 = vpop.f32.mrb[0].mxu0
      %2237 = vdwg.mxu0
      %v2238 = vpack.c.bf16 %v2212, %v2209
      %v2239 = vpack.c.bf16 %v2220, %v2217
      %v2240 = vpack.c.bf16 %v2228, %v2225
      %v2241 = vpack.c.bf16 %v2233, %v2233
      %s2242 = scalar_lea.vmem %s3, 168
      %v2243 = vld [vmem:[%s2242] sm:$0xf]
      %v2244 = vld [vmem:[%s2242 + $0x4] sm:$0xf]
      %v2245 = vld [vmem:[%s2242 + $0x8] sm:$0xf]
      %v2246 = vld [vmem:[%s2242 + $0xc] sm:$0xf]
      %v2247 = vld [vmem:[%s2242 + $0x10] sm:$0xf]
      %v2248 = vld [vmem:[%s2242 + $0x14] sm:$0xf]
      %v2255 = vunpack.c.l.b16 %v2243
      %v2256 = vunpack.c.l.b16 %v2244
      %v2257 = vunpack.c.l.b16 %v2245
      %v2258 = vunpack.c.l.b16 %v2246
      %v2259 = vunpack.c.l.b16 %v2247
      %v2260 = vunpack.c.l.b16 %v2248
      %v2261 = vpack.c.b16 %v2256, %v2255
      %v2262 = vpack.c.b16 %v2258, %v2257
      %v2263 = vpack.c.b16 %v2260, %v2259
      %v2268 = vsel %vm895, %v2238, 0
      %v2271 = vsel %vm895, %v2239, 0
      %v2274 = vsel %vm895, %v2240, 0
      %v2277 = vsel %vm895, %v2241, 0
      %2279 = vmatprep.subr.bf16.mxu0 0
      %2280 = vmatpush1.bf16.msra.mxu0 %v2261
      %2281 = vmatprep.subr.bf16.mxu0 0
      %2282 = vmatpush1.bf16.msra.mxu0 %v2262
      %2283 = vmatprep.subr.bf16.mxu0 0
      %2284 = vmatpush1.bf16.msra.mxu0 %v2263
      %2285 = vmatprep.subr.bf16.mxu0 0
      %2286 = vmatpush1.bf16.msra.mxu0 0
      %2287 = vmatprep.subr.bf16.mxu0 0
      %2288 = vmatpush1.bf16.msra.mxu0 0
      %2289 = vmatprep.subr.bf16.mxu0 0
      %2290 = vmatpush1.bf16.msra.mxu0 0
      %2291 = vmatprep.subr.bf16.mxu0 0
      %2292 = vmatpush1.bf16.msra.mxu0 0
      %2293 = vmatprep.subr.bf16.mxu0 0
      %2294 = vmatpush1.bf16.msra.mxu0 0
      %2295 = vmatprep.subr.bf16.mxu0 0
      %2296 = vmatpush1.bf16.msra.mxu0 0
      %2297 = vmatprep.subr.bf16.mxu0 0
      %2298 = vmatpush1.bf16.msra.mxu0 0
      %2299 = vmatprep.subr.bf16.mxu0 0
      %2300 = vmatpush1.bf16.msra.mxu0 0
      %2301 = vmatprep.subr.bf16.mxu0 0
      %2302 = vmatpush1.bf16.msra.mxu0 0
      %2303 = vmatprep.subr.bf16.mxu0 0
      %2304 = vmatpush1.bf16.msra.mxu0 0
      %2305 = vmatprep.subr.bf16.mxu0 0
      %2306 = vmatpush1.bf16.msra.mxu0 0
      %2307 = vmatprep.subr.bf16.mxu0 0
      %2308 = vmatpush1.bf16.msra.mxu0 0
      %2309 = vmatprep.subr.bf16.mxu0 0
      %2310 = vmatpush1.bf16.msra.mxu0 0
      %2311 = vmatprep.mubr.bf16.mxu0 0
      %2312 = vmatmul.mubr.bf16.gmra.mrb[0].mxu0 %v2268
      %v2313 = vpop.f32.mrb[0].mxu0
      %v2314 = vadd.f32 0.0, %v2313
      %v2315 = vpop.f32.mrb[0].mxu0
      %v2316 = vpop.f32.mrb[0].mxu0
      %v2317 = vadd.f32 0.0, %v2316
      %v2318 = vpop.f32.mrb[0].mxu0
      %2319 = vmatprep.mubr.bf16.mxu0 0
      %2320 = vmatmul.mubr.bf16.gmra.mrb[0].mxu0 %v2271
      %v2321 = vpop.f32.mrb[0].mxu0
      %v2322 = vadd.f32 0.0, %v2321
      %v2323 = vpop.f32.mrb[0].mxu0
      %v2324 = vpop.f32.mrb[0].mxu0
      %v2325 = vadd.f32 0.0, %v2324
      %v2326 = vpop.f32.mrb[0].mxu0
      %2327 = vmatprep.mubr.bf16.mxu0 0
      %2328 = vmatmul.mubr.bf16.gmra.mrb[0].mxu0 %v2274
      %v2329 = vpop.f32.mrb[0].mxu0
      %v2330 = vadd.f32 0.0, %v2329
      %v2331 = vpop.f32.mrb[0].mxu0
      %v2332 = vpop.f32.mrb[0].mxu0
      %v2333 = vadd.f32 0.0, %v2332
      %v2334 = vpop.f32.mrb[0].mxu0
      %2335 = vmatprep.mubr.bf16.mxu0 0
      %2336 = vmatmul.mubr.bf16.gmra.mrb[0].mxu0 %v2277
      %v2337 = vpop.f32.mrb[0].mxu0
      %v2338 = vadd.f32 0.0, %v2337
      %v2339 = vpop.f32.mrb[0].mxu0
      %v2340 = vpop.f32.mrb[0].mxu0
      %v2341 = vpop.f32.mrb[0].mxu0
      %2342 = vdwg.mxu0
      %v2343 = vadd.f32 %v2129, %v2314
      %v2344 = vadd.f32 %v2130, %v2317
      %v2345 = vadd.f32 %v2131, %v2322
      %v2346 = vadd.f32 %v2132, %v2325
      %v2347 = vadd.f32 %v2133, %v2330
      %v2348 = vadd.f32 %v2134, %v2333
      %v2349 = vadd.f32 %v2135, %v2338
      %s2350 = scalar_lea.vmem %s4, 224
      %v2351 = vld [vmem:[%s2350] sm:$0xf]
      %v2352 = vld [vmem:[%s2350 + $0x4] sm:$0xf]
      %v2353 = vld [vmem:[%s2350 + $0x8] sm:$0xf]
      %v2354 = vld [vmem:[%s2350 + $0xc] sm:$0xf]
      %v2355 = vld [vmem:[%s2350 + $0x10] sm:$0xf]
      %v2356 = vld [vmem:[%s2350 + $0x14] sm:$0xf]
      %v2357 = vld [vmem:[%s2350 + $0x18] sm:$0xf]
      %v2365 = vunpack.c.l.b16 %v2351
      %v2366 = vunpack.c.l.b16 %v2352
      %v2367 = vunpack.c.l.b16 %v2353
      %v2368 = vunpack.c.l.b16 %v2354
      %v2369 = vunpack.c.l.b16 %v2355
      %v2370 = vunpack.c.l.b16 %v2356
      %v2371 = vunpack.c.l.b16 %v2357
      %v2372 = vpack.c.b16 %v2366, %v2365
      %v2373 = vpack.c.b16 %v2368, %v2367
      %v2374 = vpack.c.b16 %v2370, %v2369
      %v2375 = vpack.c.b16 %v2371, %v2371
      %v2377 = vsel %vm673, %v2372, 0
      %v2380 = vsel %vm673, %v2373, 0
      %v2383 = vsel %vm673, %v2374, 0
      %v2386 = vsel %vm673, %v2375, 0
      %2388 = vmatprep.subr.bf16.mxu0 0
      %2389 = vmatpush1.bf16.msra.mxu0 %v644
      %2390 = vmatprep.subr.bf16.mxu0 0
      %2391 = vmatpush1.bf16.msra.mxu0 %v645
      %2392 = vmatprep.subr.bf16.mxu0 0
      %2393 = vmatpush1.bf16.msra.mxu0 %v646
      %2394 = vmatprep.subr.bf16.mxu0 0
      %2395 = vmatpush1.bf16.msra.mxu0 %v688
      %2396 = vmatprep.subr.bf16.mxu0 0
      %2397 = vmatpush1.bf16.msra.mxu0 0
      %2398 = vmatprep.subr.bf16.mxu0 0
      %2399 = vmatpush1.bf16.msra.mxu0 0
      %2400 = vmatprep.subr.bf16.mxu0 0
      %2401 = vmatpush1.bf16.msra.mxu0 0
      %2402 = vmatprep.subr.bf16.mxu0 0
      %2403 = vmatpush1.bf16.msra.mxu0 0
      %2404 = vmatprep.subr.bf16.mxu0 0
      %2405 = vmatpush1.bf16.msra.mxu0 0
      %2406 = vmatprep.subr.bf16.mxu0 0
      %2407 = vmatpush1.bf16.msra.mxu0 0
      %2408 = vmatprep.subr.bf16.mxu0 0
      %2409 = vmatpush1.bf16.msra.mxu0 0
      %2410 = vmatprep.subr.bf16.mxu0 0
      %2411 = vmatpush1.bf16.msra.mxu0 0
      %2412 = vmatprep.subr.bf16.mxu0 0
      %2413 = vmatpush1.bf16.msra.mxu0 0
      %2414 = vmatprep.subr.bf16.mxu0 0
      %2415 = vmatpush1.bf16.msra.mxu0 0
      %2416 = vmatprep.subr.bf16.mxu0 0
      %2417 = vmatpush1.bf16.msra.mxu0 0
      %2418 = vmatprep.subr.bf16.mxu0 0
      %2419 = vmatpush1.bf16.msra.mxu0 0
      %2420 = vmatprep.mubr.bf16.mxu0 0
      %2421 = vmatmul.mubr.bf16.gmra.mrb[0].mxu0 %v2377
      %v2422 = vpop.f32.mrb[0].mxu0
      %v2423 = vadd.f32 0.0, %v2422
      %v2424 = vpop.f32.mrb[0].mxu0
      %v2425 = vpop.f32.mrb[0].mxu0
      %v2426 = vadd.f32 0.0, %v2425
      %v2427 = vpop.f32.mrb[0].mxu0
      %2428 = vmatprep.mubr.bf16.mxu0 0
      %2429 = vmatmul.mubr.bf16.gmra.mrb[0].mxu0 %v2380
      %v2430 = vpop.f32.mrb[0].mxu0
      %v2431 = vadd.f32 0.0, %v2430
      %v2432 = vpop.f32.mrb[0].mxu0
      %v2433 = vpop.f32.mrb[0].mxu0
      %v2434 = vadd.f32 0.0, %v2433
      %v2435 = vpop.f32.mrb[0].mxu0
      %2436 = vmatprep.mubr.bf16.mxu0 0
      %2437 = vmatmul.mubr.bf16.gmra.mrb[0].mxu0 %v2383
      %v2438 = vpop.f32.mrb[0].mxu0
      %v2439 = vadd.f32 0.0, %v2438
      %v2440 = vpop.f32.mrb[0].mxu0
      %v2441 = vpop.f32.mrb[0].mxu0
      %v2442 = vadd.f32 0.0, %v2441
      %v2443 = vpop.f32.mrb[0].mxu0
      %2444 = vmatprep.mubr.bf16.mxu0 0
      %2445 = vmatmul.mubr.bf16.gmra.mrb[0].mxu0 %v2386
      %v2446 = vpop.f32.mrb[0].mxu0
      %v2447 = vadd.f32 0.0, %v2446
      %v2448 = vpop.f32.mrb[0].mxu0
      %v2449 = vpop.f32.mrb[0].mxu0
      %v2450 = vpop.f32.mrb[0].mxu0
      %2451 = vdwg.mxu0
      %v2452 = vpack.c.bf16 %v2426, %v2423
      %v2453 = vpack.c.bf16 %v2434, %v2431
      %v2454 = vpack.c.bf16 %v2442, %v2439
      %v2455 = vpack.c.bf16 %v2447, %v2447
      %s2456 = scalar_lea.vmem %s3, 192
      %v2457 = vld [vmem:[%s2456] sm:$0xf]
      %v2458 = vld [vmem:[%s2456 + $0x4] sm:$0xf]
      %v2459 = vld [vmem:[%s2456 + $0x8] sm:$0xf]
      %v2460 = vld [vmem:[%s2456 + $0xc] sm:$0xf]
      %v2461 = vld [vmem:[%s2456 + $0x10] sm:$0xf]
      %v2462 = vld [vmem:[%s2456 + $0x14] sm:$0xf]
      %v2469 = vunpack.c.l.b16 %v2457
      %v2470 = vunpack.c.l.b16 %v2458
      %v2471 = vunpack.c.l.b16 %v2459
      %v2472 = vunpack.c.l.b16 %v2460
      %v2473 = vunpack.c.l.b16 %v2461
      %v2474 = vunpack.c.l.b16 %v2462
      %v2475 = vpack.c.b16 %v2470, %v2469
      %v2476 = vpack.c.b16 %v2472, %v2471
      %v2477 = vpack.c.b16 %v2474, %v2473
      %v2482 = vsel %vm895, %v2452, 0
      %v2485 = vsel %vm895, %v2453, 0
      %v2488 = vsel %vm895, %v2454, 0
      %v2491 = vsel %vm895, %v2455, 0
      %2493 = vmatprep.subr.bf16.mxu0 0
      %2494 = vmatpush1.bf16.msra.mxu0 %v2475
      %2495 = vmatprep.subr.bf16.mxu0 0
      %2496 = vmatpush1.bf16.msra.mxu0 %v2476
      %2497 = vmatprep.subr.bf16.mxu0 0
      %2498 = vmatpush1.bf16.msra.mxu0 %v2477
      %2499 = vmatprep.subr.bf16.mxu0 0
      %2500 = vmatpush1.bf16.msra.mxu0 0
      %2501 = vmatprep.subr.bf16.mxu0 0
      %2502 = vmatpush1.bf16.msra.mxu0 0
      %2503 = vmatprep.subr.bf16.mxu0 0
      %2504 = vmatpush1.bf16.msra.mxu0 0
      %2505 = vmatprep.subr.bf16.mxu0 0
      %2506 = vmatpush1.bf16.msra.mxu0 0
      %2507 = vmatprep.subr.bf16.mxu0 0
      %2508 = vmatpush1.bf16.msra.mxu0 0
      %2509 = vmatprep.subr.bf16.mxu0 0
      %2510 = vmatpush1.bf16.msra.mxu0 0
      %2511 = vmatprep.subr.bf16.mxu0 0
      %2512 = vmatpush1.bf16.msra.mxu0 0
      %2513 = vmatprep.subr.bf16.mxu0 0
      %2514 = vmatpush1.bf16.msra.mxu0 0
      %2515 = vmatprep.subr.bf16.mxu0 0
      %2516 = vmatpush1.bf16.msra.mxu0 0
      %2517 = vmatprep.subr.bf16.mxu0 0
      %2518 = vmatpush1.bf16.msra.mxu0 0
      %2519 = vmatprep.subr.bf16.mxu0 0
      %2520 = vmatpush1.bf16.msra.mxu0 0
      %2521 = vmatprep.subr.bf16.mxu0 0
      %2522 = vmatpush1.bf16.msra.mxu0 0
      %2523 = vmatprep.subr.bf16.mxu0 0
      %2524 = vmatpush1.bf16.msra.mxu0 0
      %2525 = vmatprep.mubr.bf16.mxu0 0
      %2526 = vmatmul.mubr.bf16.gmra.mrb[0].mxu0 %v2482
      %v2527 = vpop.f32.mrb[0].mxu0
      %v2528 = vadd.f32 0.0, %v2527
      %v2529 = vpop.f32.mrb[0].mxu0
      %v2530 = vpop.f32.mrb[0].mxu0
      %v2531 = vadd.f32 0.0, %v2530
      %v2532 = vpop.f32.mrb[0].mxu0
      %2533 = vmatprep.mubr.bf16.mxu0 0
      %2534 = vmatmul.mubr.bf16.gmra.mrb[0].mxu0 %v2485
      %v2535 = vpop.f32.mrb[0].mxu0
      %v2536 = vadd.f32 0.0, %v2535
      %v2537 = vpop.f32.mrb[0].mxu0
      %v2538 = vpop.f32.mrb[0].mxu0
      %v2539 = vadd.f32 0.0, %v2538
      %v2540 = vpop.f32.mrb[0].mxu0
      %2541 = vmatprep.mubr.bf16.mxu0 0
      %2542 = vmatmul.mubr.bf16.gmra.mrb[0].mxu0 %v2488
      %v2543 = vpop.f32.mrb[0].mxu0
      %v2544 = vadd.f32 0.0, %v2543
      %v2545 = vpop.f32.mrb[0].mxu0
      %v2546 = vpop.f32.mrb[0].mxu0
      %v2547 = vadd.f32 0.0, %v2546
      %v2548 = vpop.f32.mrb[0].mxu0
      %2549 = vmatprep.mubr.bf16.mxu0 0
      %2550 = vmatmul.mubr.bf16.gmra.mrb[0].mxu0 %v2491
      %v2551 = vpop.f32.mrb[0].mxu0
      %v2552 = vadd.f32 0.0, %v2551
      %v2553 = vpop.f32.mrb[0].mxu0
      %v2554 = vpop.f32.mrb[0].mxu0
      %v2555 = vpop.f32.mrb[0].mxu0
      %2556 = vdwg.mxu0
      %v2557 = vadd.f32 %v2343, %v2528
      %v2558 = vadd.f32 %v2344, %v2531
      %v2559 = vadd.f32 %v2345, %v2536
      %v2560 = vadd.f32 %v2346, %v2539
      %v2561 = vadd.f32 %v2347, %v2544
      %v2562 = vadd.f32 %v2348, %v2547
      %v2563 = vadd.f32 %v2349, %v2552
      %v2564 = vld [vmem:[%s5] sm:$0x1]
      %v2566 = vlaneseq
      %v2567 = vshrl.u32 %v2566, 7
      %v2568 = vsub.s32 0, %v2567
      %v2569 = vrot.slane %v2564, %v2568
      %v2571 = vadd.f32 %v2557, %v2569
      %v2572 = vadd.f32 %v2558, %v2569
      %v2573 = vadd.f32 %v2559, %v2569
      %v2574 = vadd.f32 %v2560, %v2569
      %v2575 = vadd.f32 %v2561, %v2569
      %v2576 = vadd.f32 %v2562, %v2569
      %v2577 = vadd.f32 %v2563, %v2569
      %vm2578 = vcmp.ge.f32.partialorder %v2571, 0.0
      %vm2579 = vcmp.ge.f32.partialorder %v2572, 0.0
      %vm2580 = vcmp.ge.f32.partialorder %v2573, 0.0
      %vm2581 = vcmp.ge.f32.partialorder %v2574, 0.0
      %vm2582 = vcmp.ge.f32.partialorder %v2575, 0.0
      %vm2583 = vcmp.ge.f32.partialorder %v2576, 0.0
      %vm2584 = vcmp.ge.f32.partialorder %v2577, 0.0
      %v2585 = vmul.f32 %v2571, 0.1
      %v2586 = vmul.f32 %v2572, 0.1
      %v2587 = vmul.f32 %v2573, 0.1
      %v2588 = vmul.f32 %v2574, 0.1
      %v2589 = vmul.f32 %v2575, 0.1
      %v2590 = vmul.f32 %v2576, 0.1
      %v2591 = vmul.f32 %v2577, 0.1
      %v2592 = vsel %vm2578, %v2571, %v2585
      %v2593 = vsel %vm2579, %v2572, %v2586
      %v2594 = vsel %vm2580, %v2573, %v2587
      %v2595 = vsel %vm2581, %v2574, %v2588
      %v2596 = vsel %vm2582, %v2575, %v2589
      %v2597 = vsel %vm2583, %v2576, %v2590
      %v2598 = vsel %vm2584, %v2577, %v2591
      %v2599 = vld [vmem:[%s6] sm:$0xff]
      %v2600 = vld [vmem:[%s6 + $0x8] sm:$0xff]
      %v2601 = vld [vmem:[%s6 + $0x10] sm:$0xff]
      %v2602 = vld [vmem:[%s6 + $0x18] sm:$0xff]
      %v2603 = vld [vmem:[%s6 + $0x20] sm:$0xff]
      %v2604 = vld [vmem:[%s6 + $0x28] sm:$0xff]
      %v2605 = vld [vmem:[%s6 + $0x30] sm:$0xff]
      %v2606 = vmul.f32 %v2592, %v2599
      %v2607 = vmul.f32 %v2593, %v2600
      %v2608 = vmul.f32 %v2594, %v2601
      %v2609 = vmul.f32 %v2595, %v2602
      %v2610 = vmul.f32 %v2596, %v2603
      %v2611 = vmul.f32 %v2597, %v2604
      %v2612 = vmul.f32 %v2598, %v2605
      %v2613 = vadd.f32 %v2606, %v2607
      %v2614 = vadd.f32 %v2613, %v2608
      %v2615 = vadd.f32 %v2614, %v2609
      %v2616 = vadd.f32 %v2615, %v2610
      %v2617 = vadd.f32 %v2616, %v2611
      %v2618 = vadd.f32 %v2617, %v2612
      %v2619 = vrot.slane %v2618, 4
      %v2620 = vadd.f32 %v2618, %v2619
      %v2621 = vrot.slane %v2620, 2
      %v2622 = vadd.f32 %v2620, %v2621
      %v2623 = vrot.slane %v2622, 1
      %v2624 = vadd.f32 %v2622, %v2623
      %2625 = vst [vmem:[%s274] sm:$0x1] %v2624
      %p2626 = scmp.lt.s32.totalorder %s18, 1
      %s2627 = scalar_select %p2626, %s18, 1
      %s2628 = scalar_lea.vmem %s7, %s2627
      // Predicated region
      $region49: #{two_layer_cnn_pro_forward.1} parent=47 // pred_check
        %p2629 = pneg %p188
      $region50: #{two_layer_cnn_pro_forward.1} parent=47 // pred_check_branch
        %2631 = sbr.rel (%p2629) target = $region52
      $region51: #{two_layer_cnn_pro_forward.1} parent=47 // pred_region
        _
      $region52: #{two_layer_cnn_pro_forward.1} parent=47 // pred_fallthru
        _
    $region48: #{two_layer_cnn_pro_forward.1} parent=5 // pred_fallthru
      _
    %p2632 = scmp.le.s32.totalorder 2, %s13
    // Predicated region
    $region53: #{two_layer_cnn_pro_forward.1} parent=5 // pred_check
      %p2633 = pneg %p2632
    $region54: #{two_layer_cnn_pro_forward.1} parent=5 // pred_check_branch
      %2635 = sbr.rel (%p2633) target = $region56
    $region55: #{two_layer_cnn_pro_forward.1} parent=5 // pred_region
      %s2636 = ssub.s32 %s13, 2
      // Predicated region
      $region57: #{two_layer_cnn_pro_forward.1} parent=55 // pred_check
        %p2637 = pneg %p194
      $region58: #{two_layer_cnn_pro_forward.1} parent=55 // pred_check_branch
        %2639 = sbr.rel (%p2637) target = $region60
      $region59: #{two_layer_cnn_pro_forward.1} parent=55 // pred_region
        %p2640 = scmp.lt.s32.totalorder %s19, 1
        %s2641 = scalar_select %p2640, %s19, 1
        %s2642 = scalar_lea.vmem %s7, %s2641
      $region60: #{two_layer_cnn_pro_forward.1} parent=55 // pred_fallthru
        _
    $region56: #{two_layer_cnn_pro_forward.1} parent=5 // pred_fallthru
      _
  $region6: #{two_layer_cnn_pro_forward.1} parent=0 // loop_footer
    %s17 = sadd.s32 1, %s13
  $region7: #{two_layer_cnn_pro_forward.1} parent=0 // loop_footer_branch
    %12 = sbr.rel target = $region3
  $region8: #{two_layer_cnn_pro_forward.1} parent=0 // loop_exit
    _

</llo_original>
